<compile_context>
chip_gen: v7x
topology: tpu7x:2x2x1
jax: 0.10.0
libtpu: 0.0.40
codegen_flags: <defaults>
</compile_context>

<pallas_src>
import functools
import math

import jax
import jax.numpy as jnp
import numpy as np
from jax.experimental import pallas as pl
from jax.experimental.pallas import tpu as pltpu


# ----------------------------------------------------------------------------
# Fused kernel: one batch element per grid step.
#   x_ref  : (1, S, D)      activations, sequence rows pre-permuted (mxu_dtype)
#   wh_ref : (H, D, 3*Dh)   head-packed QKV weight (mxu_dtype)
#   wo_ref : (D, D)         out-projection weight, already transposed (mxu_dtype)
#   b_ref  : (1, D)         out-projection bias (f32)
#   o_ref  : (1, S, D)      output (f32), in the module's original row order
# ----------------------------------------------------------------------------
def _fused_attention_kernel(x_ref, wh_ref, wo_ref, b_ref, o_ref, *, H, Dh, mxu_dtype):
    S = x_ref.shape[1]
    D = x_ref.shape[2]
    G = S // H  # rows of the final output produced per head

    # ---- QKV projection, produced directly in head-major (H, S, 3*Dh) layout ----
    x = x_ref[0]                                             # (S, D), permuted rows
    xb = jnp.broadcast_to(x[None, :, :], (H, S, D))          # cheap leading-dim bcast
    qkv = jnp.einsum("hsd,hde->hse", xb, wh_ref[...],
                     preferred_element_type=jnp.float32)     # (H, S, 3*Dh) f32

    q = qkv[:, :, 0:Dh].astype(mxu_dtype)                    # (H, S, Dh)
    k = qkv[:, :, Dh:2 * Dh].astype(mxu_dtype)               # (H, S, Dh)
    v = qkv[:, :, 2 * Dh:3 * Dh].astype(mxu_dtype)           # (H, S, Dh)

    # ---- batched-head scaled-dot-product attention (softmax math in f32) --------
    scale = 1.0 / math.sqrt(Dh)
    s = jnp.einsum("hqd,hkd->hqk", q, k,
                   preferred_element_type=jnp.float32) * scale      # (H, S, S)
    s = s - jnp.max(s, axis=-1, keepdims=True)
    p = jnp.exp(s)
    p = p * pl.reciprocal(jnp.sum(p, axis=-1, keepdims=True), approx=True)
    o = jnp.einsum("hqk,hkd->hqd", p.astype(mxu_dtype), v,
                   preferred_element_type=jnp.float32)              # (H, S, Dh) f32
    # Because the wrapper permuted the query rows, o[h, j*G + g, :] is exactly the
    # (j*Dh .. (j+1)*Dh) lane-slice of row (h*G + g) of the module's raw-reshaped
    # attention output.

    # ---- raw reshape folded into the output projection --------------------------
    # y[h*G + g, :] = sum_j o[h, j*G + g, :] @ Wo_T[j*Dh:(j+1)*Dh, :] + bias
    # -> H*H small MXU matmuls with contiguous static slices; no VMEM scratch.
    wo = wo_ref[...]                                         # (D, D)  = Wo^T
    bias = b_ref[...]                                        # (1, D)  f32
    for h in range(H):
        acc = None
        for j in range(H):
            blk = o[h, j * G:(j + 1) * G, :].astype(mxu_dtype)      # (G, Dh)
            part = jnp.dot(blk, wo[j * Dh:(j + 1) * Dh, :],
                           preferred_element_type=jnp.float32)      # (G, D) f32
            acc = part if acc is None else acc + part
        o_ref[0, h * G:(h + 1) * G, :] = acc + bias                 # lane-dense store


def attention_forward(x, w_qkv, w_out, b_out, *, heads, mxu_dtype=jnp.bfloat16):
    """x: (B, S, D) f32. w_qkv: (3D, D). w_out: (D, D). b_out: (D,). Returns (B, S, D) f32."""
    B, S, D = x.shape
    H = heads
    assert D % H == 0, "dim must be divisible by heads"
    Dh = D // H
    assert S % H == 0, "fast raw-reshape path requires seq_len % heads == 0"
    G = S // H

    # ---- one-time weight packing (plain-JAX glue, outside the kernel) ----------
    # w_heads[h, d, 0:Dh]      = W_q^T columns of head h
    # w_heads[h, d, Dh:2*Dh]   = W_k^T columns of head h
    # w_heads[h, d, 2*Dh:3*Dh] = W_v^T columns of head h
    def per_head(w):                               # w: (D, D), torch (out, in) layout
        return jnp.transpose(w.T.reshape(D, H, Dh), (1, 0, 2))      # (H, D, Dh)

    w_heads = jnp.concatenate(
        [per_head(w_qkv[0:D]), per_head(w_qkv[D:2 * D]), per_head(w_qkv[2 * D:3 * D])],
        axis=-1).astype(mxu_dtype)                                  # (H, D, 3*Dh)
    w_out_t = jnp.transpose(w_out).astype(mxu_dtype)                # (D, D)
    b_out_2d = b_out.reshape(1, D).astype(jnp.float32)              # (1, D)

    # ---- query-row permutation (wrapper-side layout plumbing) -------------------
    # Feed the kernel x with sequence rows reordered as  u = j*G + g  ->  t = g*H + j.
    # Attention is invariant to permuting key/value positions, and the permuted query
    # order turns the module's raw (B,H,S,Dh)->(B,S,D) reshape into contiguous
    # sublane slices of the per-head attention output (see kernel).
    perm = np.arange(S).reshape(G, H).T.reshape(-1)
    x_in = jnp.take(x, jnp.asarray(perm), axis=1).astype(mxu_dtype)

    kernel = functools.partial(_fused_attention_kernel, H=H, Dh=Dh,
                               mxu_dtype=mxu_dtype)
    return pl.pallas_call(
        kernel,
        out_shape=jax.ShapeDtypeStruct((B, S, D), jnp.float32),
        grid_spec=pltpu.PrefetchScalarGridSpec(
            num_scalar_prefetch=0,
            grid=(B,),                       # even extent -> both v7x TCs are fed
            in_specs=[
                pl.BlockSpec((1, S, D), lambda b: (b, 0, 0)),
                pl.BlockSpec((H, D, 3 * Dh), lambda b: (0, 0, 0)),   # weight blocks are
                pl.BlockSpec((D, D), lambda b: (0, 0)),              # not re-fetched
                pl.BlockSpec((1, D), lambda b: (0, 0)),              # across grid steps
            ],
            out_specs=pl.BlockSpec((1, S, D), lambda b: (b, 0, 0)),
        ),
        compiler_params=pltpu.CompilerParams(
            dimension_semantics=("parallel",)),
    )(x_in, w_heads, w_out_t, b_out_2d)


# ----------------------------------------------------------------------------
# Pure-JAX reference (mirrors the PyTorch forward) for a sanity check.
# ----------------------------------------------------------------------------
def attention_reference(x, w_qkv, w_out, b_out, *, heads):
    B, S, D = x.shape
    H = heads
    Dh = D // H
    qkv = x @ w_qkv.T                                 # (B, S, 3D)
    q, k, v = jnp.split(qkv, 3, axis=-1)

    def to_heads(t):
        return jnp.transpose(t.reshape(B, S, H, Dh), (0, 2, 1, 3))  # (B, H, S, Dh)

    q, k, v = map(to_heads, (q, k, v))
    s = jnp.einsum("bhqd,bhkd->bhqk", q, k) / math.sqrt(Dh)
    p = jax.nn.softmax(s, axis=-1)
    o = jnp.einsum("bhqk,bhkd->bhqd", p, v)           # (B, H, S, Dh)
    o = o.reshape(B, S, D)                            # same "raw" reshape as torch
    return o @ w_out.T + b_out


def xavier_uniform(key, shape):
    fan_out, fan_in = shape
    bound = math.sqrt(6.0 / (fan_in + fan_out))
    return jax.random.uniform(key, shape, jnp.float32, -bound, bound)


if __name__ == "__main__":
    B, S, D, H = 2, 8, 32, 4                          # dim=32, heads=4 -> Dh=8

    key = jax.random.PRNGKey(0)
    k_x, k_qkv, k_out, k_b = jax.random.split(key, 4)

    x = jax.random.normal(k_x, (B, S, D), jnp.float32)
    w_qkv = xavier_uniform(k_qkv, (3 * D, D))         # nn.Linear(dim, 3*dim, bias=False)
    w_out = xavier_uniform(k_out, (D, D))             # nn.Linear(dim, dim)
    # Module init is zeros; use a nonzero bias here so the bias-add path is exercised.
    b_out = 0.1 * jax.random.normal(k_b, (D,), jnp.float32)

    y_ref = attention_reference(x, w_qkv, w_out, b_out, heads=H)

    # Exact-semantics path (f32 MXU operands); tolerance covers the approximate
    # EUP reciprocal used for the softmax denominator.
    y_f32 = jax.block_until_ready(
        attention_forward(x, w_qkv, w_out, b_out, heads=H, mxu_dtype=jnp.float32))
    np.testing.assert_allclose(np.asarray(y_f32), np.asarray(y_ref),
                               rtol=1e-2, atol=1e-2)

    # Fast path (bf16 MXU operands, f32 accumulation / softmax); looser tolerance
    # for bf16 matmul inputs.
    y_bf16 = jax.block_until_ready(
        attention_forward(x, w_qkv, w_out, b_out, heads=H))
    np.testing.assert_allclose(np.asarray(y_bf16), np.asarray(y_ref),
                               rtol=6e-2, atol=6e-2)

    print("KERNEL_OK")
</pallas_src>

<mosaic_0001>
module attributes {stable_mosaic.version = 11 : i64} {
  func.func @_fused_attention_kernel(%arg0: i32, %arg1: memref<1x8x32xf32, #tpu.memory_space<vmem>>, %arg2: memref<4x32x24xf32, #tpu.memory_space<vmem>>, %arg3: memref<32x32xf32, #tpu.memory_space<vmem>>, %arg4: memref<1x32xf32, #tpu.memory_space<vmem>>, %arg5: memref<1x8x32xf32, #tpu.memory_space<vmem>>) attributes {dimension_semantics = [#tpu.dimension_semantics<parallel>], iteration_bounds = array<i64: 2>, scalar_prefetch = 0 : i64, scratch_operands = 0 : i64, tpu.core_type = #tpu.core_type<tc>, window_params = [{transform_indices = @transform_0, window_bounds = array<i64: 1, 8, 32>}, {pipeline_mode = #tpu.pipeline_mode<synchronous>, transform_indices = @transform_1, window_bounds = array<i64: 4, 32, 24>}, {pipeline_mode = #tpu.pipeline_mode<synchronous>, transform_indices = @transform_2, window_bounds = array<i64: 32, 32>}, {pipeline_mode = #tpu.pipeline_mode<synchronous>, transform_indices = @transform_3, window_bounds = array<i64: 1, 32>}, {transform_indices = @transform_4, window_bounds = array<i64: 1, 8, 32>}]} {
    %c0 = arith.constant 0 : index
    %c0_0 = arith.constant 0 : index
    %c0_1 = arith.constant 0 : index
    %0 = vector.load %arg1[%c0, %c0_0, %c0_1] : memref<1x8x32xf32, #tpu.memory_space<vmem>>, vector<1x8x32xf32>
    %1 = vector.shape_cast %0 : vector<1x8x32xf32> to vector<8x32xf32>
    %2 = vector.shape_cast %1 : vector<8x32xf32> to vector<1x8x32xf32>
    %3 = vector.shape_cast %2 : vector<1x8x32xf32> to vector<1x8x32xf32>
    %4 = vector.broadcast %3 : vector<1x8x32xf32> to vector<4x8x32xf32>
    %c0_2 = arith.constant 0 : index
    %c0_3 = arith.constant 0 : index
    %c0_4 = arith.constant 0 : index
    %5 = vector.load %arg2[%c0_2, %c0_3, %c0_4] : memref<4x32x24xf32, #tpu.memory_space<vmem>>, vector<4x32x24xf32>
    "tpu.trace_start"() <{level = 10 : i32, message = "hsd,hde->hse"}> : () -> ()
    %cst = arith.constant dense<0.000000e+00> : vector<4x8x24xf32>
    %6 = tpu.matmul %4, %5, %cst {dimension_numbers = #tpu.dot_dimension_numbers<[2], [1], [1], [2], [0, 0, 0, 1, 1, 2], [0], [0]>} : vector<4x8x32xf32>, vector<4x32x24xf32>, vector<4x8x24xf32> -> vector<4x8x24xf32>
    "tpu.trace_stop"() : () -> ()
    %7 = vector.extract_strided_slice %6 {offsets = [0, 0, 0], sizes = [4, 8, 8], strides = [1, 1, 1]} : vector<4x8x24xf32> to vector<4x8x8xf32>
    %8 = vector.extract_strided_slice %6 {offsets = [0, 0, 8], sizes = [4, 8, 8], strides = [1, 1, 1]} : vector<4x8x24xf32> to vector<4x8x8xf32>
    %9 = vector.extract_strided_slice %6 {offsets = [0, 0, 16], sizes = [4, 8, 8], strides = [1, 1, 1]} : vector<4x8x24xf32> to vector<4x8x8xf32>
    "tpu.trace_start"() <{level = 10 : i32, message = "hqd,hkd->hqk"}> : () -> ()
    %cst_5 = arith.constant dense<0.000000e+00> : vector<4x8x8xf32>
    %10 = tpu.matmul %7, %8, %cst_5 {dimension_numbers = #tpu.dot_dimension_numbers<[2], [2], [1], [1], [0, 0, 0, 1, 1, 1], [0], [0]>} : vector<4x8x8xf32>, vector<4x8x8xf32>, vector<4x8x8xf32> -> vector<4x8x8xf32>
    "tpu.trace_stop"() : () -> ()
    %cst_6 = arith.constant 0.353553385 : f32
    %11 = vector.broadcast %cst_6 : f32 to vector<4x8x8xf32>
    %12 = arith.mulf %10, %11 : vector<4x8x8xf32>
    %cst_7 = arith.constant dense<0xFF800000> : vector<4x8xf32>
    %13 = vector.multi_reduction <maximumf>, %12, %cst_7 [2] : vector<4x8x8xf32> to vector<4x8xf32>
    %14 = vector.shape_cast %13 : vector<4x8xf32> to vector<4x8x1xf32>
    %15 = vector.broadcast %14 : vector<4x8x1xf32> to vector<4x8x8xf32>
    %16 = arith.subf %12, %15 : vector<4x8x8xf32>
    %17 = math.exp %16 : vector<4x8x8xf32>
    %cst_8 = arith.constant dense<0.000000e+00> : vector<4x8xf32>
    %18 = vector.multi_reduction <add>, %17, %cst_8 [2] : vector<4x8x8xf32> to vector<4x8xf32>
    %19 = vector.shape_cast %18 : vector<4x8xf32> to vector<4x8x1xf32>
    %20 = tpu.reciprocal %19 {approx = true} : vector<4x8x1xf32> -> vector<4x8x1xf32>
    %21 = vector.broadcast %20 : vector<4x8x1xf32> to vector<4x8x8xf32>
    %22 = arith.mulf %17, %21 : vector<4x8x8xf32>
    "tpu.trace_start"() <{level = 10 : i32, message = "hqk,hkd->hqd"}> : () -> ()
    %cst_9 = arith.constant dense<0.000000e+00> : vector<4x8x8xf32>
    %23 = tpu.matmul %22, %9, %cst_9 {dimension_numbers = #tpu.dot_dimension_numbers<[2], [1], [1], [2], [0, 0, 0, 1, 1, 2], [0], [0]>} : vector<4x8x8xf32>, vector<4x8x8xf32>, vector<4x8x8xf32> -> vector<4x8x8xf32>
    "tpu.trace_stop"() : () -> ()
    %c0_10 = arith.constant 0 : index
    %c0_11 = arith.constant 0 : index
    %24 = vector.load %arg3[%c0_10, %c0_11] : memref<32x32xf32, #tpu.memory_space<vmem>>, vector<32x32xf32>
    %c0_12 = arith.constant 0 : index
    %c0_13 = arith.constant 0 : index
    %25 = vector.load %arg4[%c0_12, %c0_13] : memref<1x32xf32, #tpu.memory_space<vmem>>, vector<1x32xf32>
    %26 = vector.extract_strided_slice %23 {offsets = [0, 0, 0], sizes = [1, 2, 8], strides = [1, 1, 1]} : vector<4x8x8xf32> to vector<1x2x8xf32>
    %27 = vector.shape_cast %26 : vector<1x2x8xf32> to vector<2x8xf32>
    %28 = vector.extract_strided_slice %24 {offsets = [0, 0], sizes = [8, 32], strides = [1, 1]} : vector<32x32xf32> to vector<8x32xf32>
    %cst_14 = arith.constant dense<0.000000e+00> : vector<2x32xf32>
    %29 = tpu.matmul %27, %28, %cst_14 {dimension_numbers = #tpu.dot_dimension_numbers<[1], [0], [0], [1], [0, 0, 1, 1], [], []>} : vector<2x8xf32>, vector<8x32xf32>, vector<2x32xf32> -> vector<2x32xf32>
    %30 = vector.extract_strided_slice %23 {offsets = [0, 2, 0], sizes = [1, 2, 8], strides = [1, 1, 1]} : vector<4x8x8xf32> to vector<1x2x8xf32>
    %31 = vector.shape_cast %30 : vector<1x2x8xf32> to vector<2x8xf32>
    %32 = vector.extract_strided_slice %24 {offsets = [8, 0], sizes = [8, 32], strides = [1, 1]} : vector<32x32xf32> to vector<8x32xf32>
    %cst_15 = arith.constant dense<0.000000e+00> : vector<2x32xf32>
    %33 = tpu.matmul %31, %32, %cst_15 {dimension_numbers = #tpu.dot_dimension_numbers<[1], [0], [0], [1], [0, 0, 1, 1], [], []>} : vector<2x8xf32>, vector<8x32xf32>, vector<2x32xf32> -> vector<2x32xf32>
    %34 = arith.addf %29, %33 : vector<2x32xf32>
    %35 = vector.extract_strided_slice %23 {offsets = [0, 4, 0], sizes = [1, 2, 8], strides = [1, 1, 1]} : vector<4x8x8xf32> to vector<1x2x8xf32>
    %36 = vector.shape_cast %35 : vector<1x2x8xf32> to vector<2x8xf32>
    %37 = vector.extract_strided_slice %24 {offsets = [16, 0], sizes = [8, 32], strides = [1, 1]} : vector<32x32xf32> to vector<8x32xf32>
    %cst_16 = arith.constant dense<0.000000e+00> : vector<2x32xf32>
    %38 = tpu.matmul %36, %37, %cst_16 {dimension_numbers = #tpu.dot_dimension_numbers<[1], [0], [0], [1], [0, 0, 1, 1], [], []>} : vector<2x8xf32>, vector<8x32xf32>, vector<2x32xf32> -> vector<2x32xf32>
    %39 = arith.addf %34, %38 : vector<2x32xf32>
    %40 = vector.extract_strided_slice %23 {offsets = [0, 6, 0], sizes = [1, 2, 8], strides = [1, 1, 1]} : vector<4x8x8xf32> to vector<1x2x8xf32>
    %41 = vector.shape_cast %40 : vector<1x2x8xf32> to vector<2x8xf32>
    %42 = vector.extract_strided_slice %24 {offsets = [24, 0], sizes = [8, 32], strides = [1, 1]} : vector<32x32xf32> to vector<8x32xf32>
    %cst_17 = arith.constant dense<0.000000e+00> : vector<2x32xf32>
    %43 = tpu.matmul %41, %42, %cst_17 {dimension_numbers = #tpu.dot_dimension_numbers<[1], [0], [0], [1], [0, 0, 1, 1], [], []>} : vector<2x8xf32>, vector<8x32xf32>, vector<2x32xf32> -> vector<2x32xf32>
    %44 = arith.addf %39, %43 : vector<2x32xf32>
    %45 = vector.broadcast %25 : vector<1x32xf32> to vector<2x32xf32>
    %46 = arith.addf %44, %45 : vector<2x32xf32>
    %c0_18 = arith.constant 0 : index
    %c0_19 = arith.constant 0 : index
    %c0_20 = arith.constant 0 : index
    %47 = vector.load %arg5[%c0_18, %c0_19, %c0_20] : memref<1x8x32xf32, #tpu.memory_space<vmem>>, vector<1x2x32xf32>
    %48 = vector.shape_cast %47 : vector<1x2x32xf32> to vector<2x32xf32>
    %49 = vector.shape_cast %46 : vector<2x32xf32> to vector<1x2x32xf32>
    tpu.vector_store %arg5[%c0_18, %c0_19, %c0_20], %49 {strides = array<i32>} : memref<1x8x32xf32, #tpu.memory_space<vmem>>, vector<1x2x32xf32>,
    %50 = vector.extract_strided_slice %23 {offsets = [1, 0, 0], sizes = [1, 2, 8], strides = [1, 1, 1]} : vector<4x8x8xf32> to vector<1x2x8xf32>
    %51 = vector.shape_cast %50 : vector<1x2x8xf32> to vector<2x8xf32>
    %52 = vector.extract_strided_slice %24 {offsets = [0, 0], sizes = [8, 32], strides = [1, 1]} : vector<32x32xf32> to vector<8x32xf32>
    %cst_21 = arith.constant dense<0.000000e+00> : vector<2x32xf32>
    %53 = tpu.matmul %51, %52, %cst_21 {dimension_numbers = #tpu.dot_dimension_numbers<[1], [0], [0], [1], [0, 0, 1, 1], [], []>} : vector<2x8xf32>, vector<8x32xf32>, vector<2x32xf32> -> vector<2x32xf32>
    %54 = vector.extract_strided_slice %23 {offsets = [1, 2, 0], sizes = [1, 2, 8], strides = [1, 1, 1]} : vector<4x8x8xf32> to vector<1x2x8xf32>
    %55 = vector.shape_cast %54 : vector<1x2x8xf32> to vector<2x8xf32>
    %56 = vector.extract_strided_slice %24 {offsets = [8, 0], sizes = [8, 32], strides = [1, 1]} : vector<32x32xf32> to vector<8x32xf32>
    %cst_22 = arith.constant dense<0.000000e+00> : vector<2x32xf32>
    %57 = tpu.matmul %55, %56, %cst_22 {dimension_numbers = #tpu.dot_dimension_numbers<[1], [0], [0], [1], [0, 0, 1, 1], [], []>} : vector<2x8xf32>, vector<8x32xf32>, vector<2x32xf32> -> vector<2x32xf32>
    %58 = arith.addf %53, %57 : vector<2x32xf32>
    %59 = vector.extract_strided_slice %23 {offsets = [1, 4, 0], sizes = [1, 2, 8], strides = [1, 1, 1]} : vector<4x8x8xf32> to vector<1x2x8xf32>
    %60 = vector.shape_cast %59 : vector<1x2x8xf32> to vector<2x8xf32>
    %61 = vector.extract_strided_slice %24 {offsets = [16, 0], sizes = [8, 32], strides = [1, 1]} : vector<32x32xf32> to vector<8x32xf32>
    %cst_23 = arith.constant dense<0.000000e+00> : vector<2x32xf32>
    %62 = tpu.matmul %60, %61, %cst_23 {dimension_numbers = #tpu.dot_dimension_numbers<[1], [0], [0], [1], [0, 0, 1, 1], [], []>} : vector<2x8xf32>, vector<8x32xf32>, vector<2x32xf32> -> vector<2x32xf32>
    %63 = arith.addf %58, %62 : vector<2x32xf32>
    %64 = vector.extract_strided_slice %23 {offsets = [1, 6, 0], sizes = [1, 2, 8], strides = [1, 1, 1]} : vector<4x8x8xf32> to vector<1x2x8xf32>
    %65 = vector.shape_cast %64 : vector<1x2x8xf32> to vector<2x8xf32>
    %66 = vector.extract_strided_slice %24 {offsets = [24, 0], sizes = [8, 32], strides = [1, 1]} : vector<32x32xf32> to vector<8x32xf32>
    %cst_24 = arith.constant dense<0.000000e+00> : vector<2x32xf32>
    %67 = tpu.matmul %65, %66, %cst_24 {dimension_numbers = #tpu.dot_dimension_numbers<[1], [0], [0], [1], [0, 0, 1, 1], [], []>} : vector<2x8xf32>, vector<8x32xf32>, vector<2x32xf32> -> vector<2x32xf32>
    %68 = arith.addf %63, %67 : vector<2x32xf32>
    %69 = vector.broadcast %25 : vector<1x32xf32> to vector<2x32xf32>
    %70 = arith.addf %68, %69 : vector<2x32xf32>
    %c0_25 = arith.constant 0 : index
    %c2 = arith.constant 2 : index
    %c0_26 = arith.constant 0 : index
    %71 = vector.load %arg5[%c0_25, %c2, %c0_26] : memref<1x8x32xf32, #tpu.memory_space<vmem>>, vector<1x2x32xf32>
    %72 = vector.shape_cast %71 : vector<1x2x32xf32> to vector<2x32xf32>
    %73 = vector.shape_cast %70 : vector<2x32xf32> to vector<1x2x32xf32>
    tpu.vector_store %arg5[%c0_25, %c2, %c0_26], %73 {strides = array<i32>} : memref<1x8x32xf32, #tpu.memory_space<vmem>>, vector<1x2x32xf32>,
    %74 = vector.extract_strided_slice %23 {offsets = [2, 0, 0], sizes = [1, 2, 8], strides = [1, 1, 1]} : vector<4x8x8xf32> to vector<1x2x8xf32>
    %75 = vector.shape_cast %74 : vector<1x2x8xf32> to vector<2x8xf32>
    %76 = vector.extract_strided_slice %24 {offsets = [0, 0], sizes = [8, 32], strides = [1, 1]} : vector<32x32xf32> to vector<8x32xf32>
    %cst_27 = arith.constant dense<0.000000e+00> : vector<2x32xf32>
    %77 = tpu.matmul %75, %76, %cst_27 {dimension_numbers = #tpu.dot_dimension_numbers<[1], [0], [0], [1], [0, 0, 1, 1], [], []>} : vector<2x8xf32>, vector<8x32xf32>, vector<2x32xf32> -> vector<2x32xf32>
    %78 = vector.extract_strided_slice %23 {offsets = [2, 2, 0], sizes = [1, 2, 8], strides = [1, 1, 1]} : vector<4x8x8xf32> to vector<1x2x8xf32>
    %79 = vector.shape_cast %78 : vector<1x2x8xf32> to vector<2x8xf32>
    %80 = vector.extract_strided_slice %24 {offsets = [8, 0], sizes = [8, 32], strides = [1, 1]} : vector<32x32xf32> to vector<8x32xf32>
    %cst_28 = arith.constant dense<0.000000e+00> : vector<2x32xf32>
    %81 = tpu.matmul %79, %80, %cst_28 {dimension_numbers = #tpu.dot_dimension_numbers<[1], [0], [0], [1], [0, 0, 1, 1], [], []>} : vector<2x8xf32>, vector<8x32xf32>, vector<2x32xf32> -> vector<2x32xf32>
    %82 = arith.addf %77, %81 : vector<2x32xf32>
    %83 = vector.extract_strided_slice %23 {offsets = [2, 4, 0], sizes = [1, 2, 8], strides = [1, 1, 1]} : vector<4x8x8xf32> to vector<1x2x8xf32>
    %84 = vector.shape_cast %83 : vector<1x2x8xf32> to vector<2x8xf32>
    %85 = vector.extract_strided_slice %24 {offsets = [16, 0], sizes = [8, 32], strides = [1, 1]} : vector<32x32xf32> to vector<8x32xf32>
    %cst_29 = arith.constant dense<0.000000e+00> : vector<2x32xf32>
    %86 = tpu.matmul %84, %85, %cst_29 {dimension_numbers = #tpu.dot_dimension_numbers<[1], [0], [0], [1], [0, 0, 1, 1], [], []>} : vector<2x8xf32>, vector<8x32xf32>, vector<2x32xf32> -> vector<2x32xf32>
    %87 = arith.addf %82, %86 : vector<2x32xf32>
    %88 = vector.extract_strided_slice %23 {offsets = [2, 6, 0], sizes = [1, 2, 8], strides = [1, 1, 1]} : vector<4x8x8xf32> to vector<1x2x8xf32>
    %89 = vector.shape_cast %88 : vector<1x2x8xf32> to vector<2x8xf32>
    %90 = vector.extract_strided_slice %24 {offsets = [24, 0], sizes = [8, 32], strides = [1, 1]} : vector<32x32xf32> to vector<8x32xf32>
    %cst_30 = arith.constant dense<0.000000e+00> : vector<2x32xf32>
    %91 = tpu.matmul %89, %90, %cst_30 {dimension_numbers = #tpu.dot_dimension_numbers<[1], [0], [0], [1], [0, 0, 1, 1], [], []>} : vector<2x8xf32>, vector<8x32xf32>, vector<2x32xf32> -> vector<2x32xf32>
    %92 = arith.addf %87, %91 : vector<2x32xf32>
    %93 = vector.broadcast %25 : vector<1x32xf32> to vector<2x32xf32>
    %94 = arith.addf %92, %93 : vector<2x32xf32>
    %c0_31 = arith.constant 0 : index
    %c4 = arith.constant 4 : index
    %c0_32 = arith.constant 0 : index
    %95 = vector.load %arg5[%c0_31, %c4, %c0_32] : memref<1x8x32xf32, #tpu.memory_space<vmem>>, vector<1x2x32xf32>
    %96 = vector.shape_cast %95 : vector<1x2x32xf32> to vector<2x32xf32>
    %97 = vector.shape_cast %94 : vector<2x32xf32> to vector<1x2x32xf32>
    tpu.vector_store %arg5[%c0_31, %c4, %c0_32], %97 {strides = array<i32>} : memref<1x8x32xf32, #tpu.memory_space<vmem>>, vector<1x2x32xf32>,
    %98 = vector.extract_strided_slice %23 {offsets = [3, 0, 0], sizes = [1, 2, 8], strides = [1, 1, 1]} : vector<4x8x8xf32> to vector<1x2x8xf32>
    %99 = vector.shape_cast %98 : vector<1x2x8xf32> to vector<2x8xf32>
    %100 = vector.extract_strided_slice %24 {offsets = [0, 0], sizes = [8, 32], strides = [1, 1]} : vector<32x32xf32> to vector<8x32xf32>
    %cst_33 = arith.constant dense<0.000000e+00> : vector<2x32xf32>
    %101 = tpu.matmul %99, %100, %cst_33 {dimension_numbers = #tpu.dot_dimension_numbers<[1], [0], [0], [1], [0, 0, 1, 1], [], []>} : vector<2x8xf32>, vector<8x32xf32>, vector<2x32xf32> -> vector<2x32xf32>
    %102 = vector.extract_strided_slice %23 {offsets = [3, 2, 0], sizes = [1, 2, 8], strides = [1, 1, 1]} : vector<4x8x8xf32> to vector<1x2x8xf32>
    %103 = vector.shape_cast %102 : vector<1x2x8xf32> to vector<2x8xf32>
    %104 = vector.extract_strided_slice %24 {offsets = [8, 0], sizes = [8, 32], strides = [1, 1]} : vector<32x32xf32> to vector<8x32xf32>
    %cst_34 = arith.constant dense<0.000000e+00> : vector<2x32xf32>
    %105 = tpu.matmul %103, %104, %cst_34 {dimension_numbers = #tpu.dot_dimension_numbers<[1], [0], [0], [1], [0, 0, 1, 1], [], []>} : vector<2x8xf32>, vector<8x32xf32>, vector<2x32xf32> -> vector<2x32xf32>
    %106 = arith.addf %101, %105 : vector<2x32xf32>
    %107 = vector.extract_strided_slice %23 {offsets = [3, 4, 0], sizes = [1, 2, 8], strides = [1, 1, 1]} : vector<4x8x8xf32> to vector<1x2x8xf32>
    %108 = vector.shape_cast %107 : vector<1x2x8xf32> to vector<2x8xf32>
    %109 = vector.extract_strided_slice %24 {offsets = [16, 0], sizes = [8, 32], strides = [1, 1]} : vector<32x32xf32> to vector<8x32xf32>
    %cst_35 = arith.constant dense<0.000000e+00> : vector<2x32xf32>
    %110 = tpu.matmul %108, %109, %cst_35 {dimension_numbers = #tpu.dot_dimension_numbers<[1], [0], [0], [1], [0, 0, 1, 1], [], []>} : vector<2x8xf32>, vector<8x32xf32>, vector<2x32xf32> -> vector<2x32xf32>
    %111 = arith.addf %106, %110 : vector<2x32xf32>
    %112 = vector.extract_strided_slice %23 {offsets = [3, 6, 0], sizes = [1, 2, 8], strides = [1, 1, 1]} : vector<4x8x8xf32> to vector<1x2x8xf32>
    %113 = vector.shape_cast %112 : vector<1x2x8xf32> to vector<2x8xf32>
    %114 = vector.extract_strided_slice %24 {offsets = [24, 0], sizes = [8, 32], strides = [1, 1]} : vector<32x32xf32> to vector<8x32xf32>
    %cst_36 = arith.constant dense<0.000000e+00> : vector<2x32xf32>
    %115 = tpu.matmul %113, %114, %cst_36 {dimension_numbers = #tpu.dot_dimension_numbers<[1], [0], [0], [1], [0, 0, 1, 1], [], []>} : vector<2x8xf32>, vector<8x32xf32>, vector<2x32xf32> -> vector<2x32xf32>
    %116 = arith.addf %111, %115 : vector<2x32xf32>
    %117 = vector.broadcast %25 : vector<1x32xf32> to vector<2x32xf32>
    %118 = arith.addf %116, %117 : vector<2x32xf32>
    %c0_37 = arith.constant 0 : index
    %c6 = arith.constant 6 : index
    %c0_38 = arith.constant 0 : index
    %119 = vector.load %arg5[%c0_37, %c6, %c0_38] : memref<1x8x32xf32, #tpu.memory_space<vmem>>, vector<1x2x32xf32>
    %120 = vector.shape_cast %119 : vector<1x2x32xf32> to vector<2x32xf32>
    %121 = vector.shape_cast %118 : vector<2x32xf32> to vector<1x2x32xf32>
    tpu.vector_store %arg5[%c0_37, %c6, %c0_38], %121 {strides = array<i32>} : memref<1x8x32xf32, #tpu.memory_space<vmem>>, vector<1x2x32xf32>,
    return
  }
  func.func @transform_0(%arg0: i32) -> (i32, i32, i32) {
    %c0_i32 = arith.constant 0 : i32
    %c0_i32_0 = arith.constant 0 : i32
    %c0_i32_1 = arith.constant 0 : i32
    return %arg0, %c0_i32, %c0_i32_0 : i32, i32, i32
  }
  func.func @transform_1(%arg0: i32) -> (i32, i32, i32) {
    %c0_i32 = arith.constant 0 : i32
    %c0_i32_0 = arith.constant 0 : i32
    %c0_i32_1 = arith.constant 0 : i32
    %c0_i32_2 = arith.constant 0 : i32
    return %c0_i32, %c0_i32_0, %c0_i32_1 : i32, i32, i32
  }
  func.func @transform_2(%arg0: i32) -> (i32, i32) {
    %c0_i32 = arith.constant 0 : i32
    %c0_i32_0 = arith.constant 0 : i32
    %c0_i32_1 = arith.constant 0 : i32
    return %c0_i32, %c0_i32_0 : i32, i32
  }
  func.func @transform_3(%arg0: i32) -> (i32, i32) {
    %c0_i32 = arith.constant 0 : i32
    %c0_i32_0 = arith.constant 0 : i32
    %c0_i32_1 = arith.constant 0 : i32
    return %c0_i32, %c0_i32_0 : i32, i32
  }
  func.func @transform_4(%arg0: i32) -> (i32, i32, i32) {
    %c0_i32 = arith.constant 0 : i32
    %c0_i32_0 = arith.constant 0 : i32
    %c0_i32_1 = arith.constant 0 : i32
    return %arg0, %c0_i32, %c0_i32_0 : i32, i32, i32
  }
}

</mosaic_0001>

<llo_original>
// kernel: tpu_custom_call.1
$region0: #{tpu_custom_call.1}
  #allocation0 [shape = 'u32[]', space=smem, size = 0x4, offset = 0x4, fixed_abs, tag = 'smem constant byte address 0x4 - core index']
  #allocation1 [shape = 'u32[144,128]{1,0:T(1,128)}', space=vmem, size = 0x12000, scoped, tag = 'internal scratch']
  %s0 = inlined_call_operand.vmem [shape: f32[2,8,32], index: 0, kind: input, shape index: {}]
  %s1 = inlined_call_operand.vmem [shape: f32[4,32,24], index: 1, kind: input, shape index: {}]
  %s2 = inlined_call_operand.vmem [shape: f32[32,32], index: 2, kind: input, shape index: {}]
  %s3 = inlined_call_operand.vmem [shape: f32[1,32], index: 3, kind: input, shape index: {}]
  %s4 = inlined_call_operand.hbm [shape: f32[2,8,32], index: 4, kind: output, shape index: {}]
  %s5 = sld [smem:[#allocation0]]
  $region49: #{tpu_custom_call.1} parent=0
    _
  %s7 = ssub.s32 1, %s5
  %s8 = scalar_select 0, %s7, %s5
  $region1: #{tpu_custom_call.1} parent=0
    #allocation2 [shape = 'u8[8192]{0}', space=vmem, size = 0x2000, scoped, tag = 'output window, operand 0']
    #allocation3 [shape = 's32[2]{0}', space=sflag, size = 0x8, scoped, tag = 'scoped memory for tpu_custom_call.1']
    %9 = vsyncpa [#allocation3], 0
    %s10 = scalar_lea.sflag [#allocation3], 1
    %11 = vsyncpa %s10, 0
    loop: start=0, step=1, limit=4
    $region2: #{tpu_custom_call.1} parent=1 // loop_pre_header
      _
    $region3: #{tpu_custom_call.1} parent=1 // loop_header
      %s13 = sphi 0, %s17
      %p14 = scmp.ge.s32.totalorder %s13, 4
      %s23 = sphi 0, %s25
      %s26 = sphi 0, %s23
      %s27 = sphi 0, %s26
      %s43 = sphi 0, %s27
      %s47 = sphi 0, %s47
      %s49 = sphi 0, %s47
      %s50 = sphi 0, %s49
      %s64 = sphi 0, %s50
      %s68 = sphi 0, %s68
      %s70 = sphi 0, %s68
      %s71 = sphi 0, %s70
      %s85 = sphi 0, %s71
      %s89 = sphi 0, %s89
      %s91 = sphi 0, %s89
      %s92 = sphi 0, %s91
      %s106 = sphi 0, %s92
      %s112 = sphi 0, %s114
      %s115 = sphi 0, %s112
      %s116 = sphi 0, %s115
      %s132 = sphi 0, %s116
    $region4: #{tpu_custom_call.1} parent=1 // loop_header_branch
      %16 = sbr.rel (%p14) target = $region8
    $region5: #{tpu_custom_call.1} parent=1 // loop_body
      %s18 = ssub.s32 %s13, 1
      %s19 = ssub.s32 %s13, 2
      %s20 = sadd.s32 %s13, 1
      %s21 = ssub.s32 %s13, %s20
      %p22 = scmp.eq.s32.totalorder %s21, 0
      %s24 = sadd.s32 %s23, 1
      %s25 = scalar_select %p22, %s23, %s24
      %p28 = pneg %p22
      %p29 = scmp.eq.s32.totalorder %s13, 1
      %p30 = por %p28, %p29
      %p31 = scmp.ne.s32.totalorder %s23, %s26
      %p32 = scmp.eq.s32.totalorder %s13, 0
      %p33 = por %p31, %p32
      %p34 = scmp.ne.s32.totalorder %s23, %s26
      %p35 = scmp.eq.s32.totalorder %s18, 1
      %p36 = por %p34, %p35
      %p37 = scmp.ne.s32.totalorder %s26, %s27
      %p38 = scmp.eq.s32.totalorder %s18, 0
      %p39 = por %p37, %p38
      %p40 = scmp.ne.s32.totalorder %s26, %s27
      %p41 = scmp.eq.s32.totalorder %s19, 1
      %p42 = por %p40, %p41
      %p44 = scmp.ne.s32.totalorder %s27, %s43
      %p45 = scmp.eq.s32.totalorder %s19, 0
      %p46 = por %p44, %p45
      %s48 = sadd.s32 %s47, 1
      %p51 = scmp.eq.s32.totalorder %s13, 1
      %p52 = scmp.ne.s32.totalorder %s47, %s49
      %p53 = scmp.eq.s32.totalorder %s13, 0
      %p54 = por %p52, %p53
      %p55 = scmp.ne.s32.totalorder %s47, %s49
      %p56 = scmp.eq.s32.totalorder %s18, 1
      %p57 = por %p55, %p56
      %p58 = scmp.ne.s32.totalorder %s49, %s50
      %p59 = scmp.eq.s32.totalorder %s18, 0
      %p60 = por %p58, %p59
      %p61 = scmp.ne.s32.totalorder %s49, %s50
      %p62 = scmp.eq.s32.totalorder %s19, 1
      %p63 = por %p61, %p62
      %p65 = scmp.ne.s32.totalorder %s50, %s64
      %p66 = scmp.eq.s32.totalorder %s19, 0
      %p67 = por %p65, %p66
      %s69 = sadd.s32 %s68, 1
      %p72 = scmp.eq.s32.totalorder %s13, 1
      %p73 = scmp.ne.s32.totalorder %s68, %s70
      %p74 = scmp.eq.s32.totalorder %s13, 0
      %p75 = por %p73, %p74
      %p76 = scmp.ne.s32.totalorder %s68, %s70
      %p77 = scmp.eq.s32.totalorder %s18, 1
      %p78 = por %p76, %p77
      %p79 = scmp.ne.s32.totalorder %s70, %s71
      %p80 = scmp.eq.s32.totalorder %s18, 0
      %p81 = por %p79, %p80
      %p82 = scmp.ne.s32.totalorder %s70, %s71
      %p83 = scmp.eq.s32.totalorder %s19, 1
      %p84 = por %p82, %p83
      %p86 = scmp.ne.s32.totalorder %s71, %s85
      %p87 = scmp.eq.s32.totalorder %s19, 0
      %p88 = por %p86, %p87
      %s90 = sadd.s32 %s89, 1
      %p93 = scmp.eq.s32.totalorder %s13, 1
      %p94 = scmp.ne.s32.totalorder %s89, %s91
      %p95 = scmp.eq.s32.totalorder %s13, 0
      %p96 = por %p94, %p95
      %p97 = scmp.ne.s32.totalorder %s89, %s91
      %p98 = scmp.eq.s32.totalorder %s18, 1
      %p99 = por %p97, %p98
      %p100 = scmp.ne.s32.totalorder %s91, %s92
      %p101 = scmp.eq.s32.totalorder %s18, 0
      %p102 = por %p100, %p101
      %p103 = scmp.ne.s32.totalorder %s91, %s92
      %p104 = scmp.eq.s32.totalorder %s19, 1
      %p105 = por %p103, %p104
      %p107 = scmp.ne.s32.totalorder %s92, %s106
      %p108 = scmp.eq.s32.totalorder %s19, 0
      %p109 = por %p107, %p108
      %s110 = ssub.s32 %s13, %s20
      %p111 = scmp.eq.s32.totalorder %s110, 0
      %s113 = sadd.s32 %s112, 1
      %s114 = scalar_select %p111, %s112, %s113
      %p117 = pneg %p111
      %p118 = scmp.eq.s32.totalorder %s13, 1
      %p119 = por %p117, %p118
      %p120 = scmp.ne.s32.totalorder %s112, %s115
      %p121 = scmp.eq.s32.totalorder %s13, 0
      %p122 = por %p120, %p121
      %p123 = scmp.ne.s32.totalorder %s112, %s115
      %p124 = scmp.eq.s32.totalorder %s18, 1
      %p125 = por %p123, %p124
      %p126 = scmp.ne.s32.totalorder %s115, %s116
      %p127 = scmp.eq.s32.totalorder %s18, 0
      %p128 = por %p126, %p127
      %p129 = scmp.ne.s32.totalorder %s115, %s116
      %p130 = scmp.eq.s32.totalorder %s19, 1
      %p131 = por %p129, %p130
      %p133 = scmp.ne.s32.totalorder %s116, %s132
      %p134 = scmp.eq.s32.totalorder %s19, 0
      %p135 = por %p133, %p134
      %p136 = scmp.le.s32.totalorder 1, %s13
      %p137 = scmp.lt.s32.totalorder %s13, 3
      %p138 = pnand %p136, %p137
      %p139 = pneg %p138
      // Predicated region
      $region9: #{tpu_custom_call.1} parent=5 // pred_check
        _
      $region10: #{tpu_custom_call.1} parent=5 // pred_check_branch
        %141 = sbr.rel (%p138) target = $region12
      $region11: #{tpu_custom_call.1} parent=5 // pred_region
        %s142 = ssub.s32 %s13, 1
        // Predicated region
        $region13: #{tpu_custom_call.1} parent=11 // pred_check
          %p143 = pneg %p60
        $region14: #{tpu_custom_call.1} parent=11 // pred_check_branch
          %145 = sbr.rel (%p143) target = $region16
        $region15: #{tpu_custom_call.1} parent=11 // pred_region
          _
        $region16: #{tpu_custom_call.1} parent=11 // pred_fallthru
          _
        // Predicated region
        $region17: #{tpu_custom_call.1} parent=11 // pred_check
          %p146 = pneg %p81
        $region18: #{tpu_custom_call.1} parent=11 // pred_check_branch
          %148 = sbr.rel (%p146) target = $region20
        $region19: #{tpu_custom_call.1} parent=11 // pred_region
          _
        $region20: #{tpu_custom_call.1} parent=11 // pred_fallthru
          _
        // Predicated region
        $region21: #{tpu_custom_call.1} parent=11 // pred_check
          %p149 = pneg %p102
        $region22: #{tpu_custom_call.1} parent=11 // pred_check_branch
          %151 = sbr.rel (%p149) target = $region24
        $region23: #{tpu_custom_call.1} parent=11 // pred_region
          _
        $region24: #{tpu_custom_call.1} parent=11 // pred_fallthru
          _
      $region12: #{tpu_custom_call.1} parent=5 // pred_fallthru
        _
      %p152 = scmp.lt.s32.totalorder %s13, 2
      // Predicated region
      $region25: #{tpu_custom_call.1} parent=5 // pred_check
        %p153 = pneg %p152
      $region26: #{tpu_custom_call.1} parent=5 // pred_check_branch
        %155 = sbr.rel (%p153) target = $region28
      $region27: #{tpu_custom_call.1} parent=5 // pred_region
        // Predicated region
        $region29: #{tpu_custom_call.1} parent=27 // pred_check
          %p156 = pneg %p33
        $region30: #{tpu_custom_call.1} parent=27 // pred_check_branch
          %158 = sbr.rel (%p156) target = $region32
        $region31: #{tpu_custom_call.1} parent=27 // pred_region
          %p159 = scmp.lt.s32.totalorder %s13, 1
          %s160 = scalar_select %p159, %s13, 1
          %s161 = smul.addr %s160, 8
          %s162 = scalar_lea.vmem %s0, %s161
        $region32: #{tpu_custom_call.1} parent=27 // pred_fallthru
          _
      $region28: #{tpu_custom_call.1} parent=5 // pred_fallthru
        _
      %p163 = scmp.le.s32.totalorder 1, %s13
      %p164 = scmp.lt.s32.totalorder %s13, 3
      %p165 = pnand %p163, %p164
      %p166 = pneg %p165
      // Predicated region
      $region33: #{tpu_custom_call.1} parent=5 // pred_check
        _
      $region34: #{tpu_custom_call.1} parent=5 // pred_check_branch
        %168 = sbr.rel (%p165) target = $region36
      $region35: #{tpu_custom_call.1} parent=5 // pred_region
        %s169 = ssub.s32 %s13, 1
        %p170 = scmp.lt.s32.totalorder %s18, 1
        %s171 = scalar_select %p170, %s18, 1
        %s172 = smul.addr %s171, 8
        %s173 = scalar_lea.vmem %s0, %s172
        %p174 = pneg %p39
        %p175 = pneg %p36
        %p176 = pneg %p60
        %p177 = pneg %p57
        %p178 = pneg %p81
        %p179 = pneg %p78
        %p180 = pneg %p102
        %p181 = pneg %p99
        %p182 = pneg %p128
        %p183 = pneg %p125
        %s184 = sand.u32 %s115, 1
        %s185 = scalar_lea.sflag [#allocation3], %s184
        %s186 = sand.u32 %s115, 1
        %s187 = smul.addr %s186, 8
        %s188 = scalar_lea.vmem [#allocation2], %s187
        %p189 = scmp.lt.s32.totalorder %s18, 1
        %s190 = scalar_select %p189, %s18, 1
        %s191 = smul.addr %s190, 8
        %s192 = scalar_lea.vmem %s0, %s191
        %v193 = vld [vmem:[%s192] sm:$0xff]
        %v194 = vld [vmem:[%s1] sm:$0xff]
        %v195 = vld [vmem:[%s1 + $0x8] sm:$0xff]
        %v196 = vld [vmem:[%s1 + $0x10] sm:$0xff]
        %v197 = vld [vmem:[%s1 + $0x18] sm:$0xff]
        %v198 = vld [vmem:[%s1 + $0x20] sm:$0xff]
        %v199 = vld [vmem:[%s1 + $0x28] sm:$0xff]
        %v200 = vld [vmem:[%s1 + $0x30] sm:$0xff]
        %v201 = vld [vmem:[%s1 + $0x38] sm:$0xff]
        %v202 = vld [vmem:[%s1 + $0x40] sm:$0xff]
        %v203 = vld [vmem:[%s1 + $0x48] sm:$0xff]
        %v204 = vld [vmem:[%s1 + $0x50] sm:$0xff]
        %v205 = vld [vmem:[%s1 + $0x58] sm:$0xff]
        %v206 = vld [vmem:[%s1 + $0x60] sm:$0xff]
        %v207 = vld [vmem:[%s1 + $0x68] sm:$0xff]
        %v208 = vld [vmem:[%s1 + $0x70] sm:$0xff]
        %v209 = vld [vmem:[%s1 + $0x78] sm:$0xff]
        %vm210 = vcmask 261120
        %v212 = vsel %vm210, %v193, 0
        %214 = vmatprep.subr.mxu0 0.0
        %215 = vmatpush1.msra.mxu0 %v194
        %216 = vmatprep.subr.mxu0 0.0
        %217 = vmatpush1.msra.mxu0 %v195
        %218 = vmatprep.subr.mxu0 0.0
        %219 = vmatpush1.msra.mxu0 %v196
        %220 = vmatprep.subr.mxu0 0.0
        %221 = vmatpush1.msra.mxu0 %v197
        %222 = vmatprep.subr.mxu0 0.0
        %223 = vmatpush1.msra.mxu0 0.0
        %224 = vmatprep.subr.mxu0 0.0
        %225 = vmatpush1.msra.mxu0 0.0
        %226 = vmatprep.subr.mxu0 0.0
        %227 = vmatpush1.msra.mxu0 0.0
        %228 = vmatprep.subr.mxu0 0.0
        %229 = vmatpush1.msra.mxu0 0.0
        %230 = vmatprep.subr.mxu0 0.0
        %231 = vmatpush1.msra.mxu0 0.0
        %232 = vmatprep.subr.mxu0 0.0
        %233 = vmatpush1.msra.mxu0 0.0
        %234 = vmatprep.subr.mxu0 0.0
        %235 = vmatpush1.msra.mxu0 0.0
        %236 = vmatprep.subr.mxu0 0.0
        %237 = vmatpush1.msra.mxu0 0.0
        %238 = vmatprep.subr.mxu0 0.0
        %239 = vmatpush1.msra.mxu0 0.0
        %240 = vmatprep.subr.mxu0 0.0
        %241 = vmatpush1.msra.mxu0 0.0
        %242 = vmatprep.subr.mxu0 0.0
        %243 = vmatpush1.msra.mxu0 0.0
        %244 = vmatprep.subr.mxu0 0.0
        %245 = vmatpush1.msra.mxu0 0.0
        %246 = vmatprep.subr.mxu0 0.0
        %247 = vmatpush1.msra.mxu0 0.0
        %248 = vmatprep.subr.mxu0 0.0
        %249 = vmatpush1.msra.mxu0 0.0
        %250 = vmatprep.subr.mxu0 0.0
        %251 = vmatpush1.msra.mxu0 0.0
        %252 = vmatprep.subr.mxu0 0.0
        %253 = vmatpush1.msra.mxu0 0.0
        %254 = vmatprep.subr.mxu0 0.0
        %255 = vmatpush1.msra.mxu0 0.0
        %256 = vmatprep.subr.mxu0 0.0
        %257 = vmatpush1.msra.mxu0 0.0
        %258 = vmatprep.subr.mxu0 0.0
        %259 = vmatpush1.msra.mxu0 0.0
        %260 = vmatprep.subr.mxu0 0.0
        %261 = vmatpush1.msra.mxu0 0.0
        %262 = vmatprep.subr.mxu0 0.0
        %263 = vmatpush1.msra.mxu0 0.0
        %264 = vmatprep.subr.mxu0 0.0
        %265 = vmatpush1.msra.mxu0 0.0
        %266 = vmatprep.subr.mxu0 0.0
        %267 = vmatpush1.msra.mxu0 0.0
        %268 = vmatprep.subr.mxu0 0.0
        %269 = vmatpush1.msra.mxu0 0.0
        %270 = vmatprep.subr.mxu0 0.0
        %271 = vmatpush1.msra.mxu0 0.0
        %272 = vmatprep.subr.mxu0 0.0
        %273 = vmatpush1.msra.mxu0 0.0
        %274 = vmatprep.subr.mxu0 0.0
        %275 = vmatpush1.msra.mxu0 0.0
        %276 = vmatprep.subr.mxu0 0.0
        %277 = vmatpush1.msra.mxu0 0.0
        %278 = vmatprep.mubr.f32.mxu0 0.0
        %279 = vmatmul.mubr.f32.gmra.mrb[0].mxu0 %v212
        %v280 = vpop.f32.mrb[0].mxu0
        %v281 = vadd.f32 0.0, %v280
        %v282 = vpop.f32.mrb[0].mxu0
        %283 = vdwg.mxu0
        %284 = vmatprep.subr.mxu0 0.0
        %285 = vmatpush1.msra.mxu0 %v198
        %286 = vmatprep.subr.mxu0 0.0
        %287 = vmatpush1.msra.mxu0 %v199
        %288 = vmatprep.subr.mxu0 0.0
        %289 = vmatpush1.msra.mxu0 %v200
        %290 = vmatprep.subr.mxu0 0.0
        %291 = vmatpush1.msra.mxu0 %v201
        %292 = vmatprep.subr.mxu0 0.0
        %293 = vmatpush1.msra.mxu0 0.0
        %294 = vmatprep.subr.mxu0 0.0
        %295 = vmatpush1.msra.mxu0 0.0
        %296 = vmatprep.subr.mxu0 0.0
        %297 = vmatpush1.msra.mxu0 0.0
        %298 = vmatprep.subr.mxu0 0.0
        %299 = vmatpush1.msra.mxu0 0.0
        %300 = vmatprep.subr.mxu0 0.0
        %301 = vmatpush1.msra.mxu0 0.0
        %302 = vmatprep.subr.mxu0 0.0
        %303 = vmatpush1.msra.mxu0 0.0
        %304 = vmatprep.subr.mxu0 0.0
        %305 = vmatpush1.msra.mxu0 0.0
        %306 = vmatprep.subr.mxu0 0.0
        %307 = vmatpush1.msra.mxu0 0.0
        %308 = vmatprep.subr.mxu0 0.0
        %309 = vmatpush1.msra.mxu0 0.0
        %310 = vmatprep.subr.mxu0 0.0
        %311 = vmatpush1.msra.mxu0 0.0
        %312 = vmatprep.subr.mxu0 0.0
        %313 = vmatpush1.msra.mxu0 0.0
        %314 = vmatprep.subr.mxu0 0.0
        %315 = vmatpush1.msra.mxu0 0.0
        %316 = vmatprep.subr.mxu0 0.0
        %317 = vmatpush1.msra.mxu0 0.0
        %318 = vmatprep.subr.mxu0 0.0
        %319 = vmatpush1.msra.mxu0 0.0
        %320 = vmatprep.subr.mxu0 0.0
        %321 = vmatpush1.msra.mxu0 0.0
        %322 = vmatprep.subr.mxu0 0.0
        %323 = vmatpush1.msra.mxu0 0.0
        %324 = vmatprep.subr.mxu0 0.0
        %325 = vmatpush1.msra.mxu0 0.0
        %326 = vmatprep.subr.mxu0 0.0
        %327 = vmatpush1.msra.mxu0 0.0
        %328 = vmatprep.subr.mxu0 0.0
        %329 = vmatpush1.msra.mxu0 0.0
        %330 = vmatprep.subr.mxu0 0.0
        %331 = vmatpush1.msra.mxu0 0.0
        %332 = vmatprep.subr.mxu0 0.0
        %333 = vmatpush1.msra.mxu0 0.0
        %334 = vmatprep.subr.mxu0 0.0
        %335 = vmatpush1.msra.mxu0 0.0
        %336 = vmatprep.subr.mxu0 0.0
        %337 = vmatpush1.msra.mxu0 0.0
        %338 = vmatprep.subr.mxu0 0.0
        %339 = vmatpush1.msra.mxu0 0.0
        %340 = vmatprep.subr.mxu0 0.0
        %341 = vmatpush1.msra.mxu0 0.0
        %342 = vmatprep.subr.mxu0 0.0
        %343 = vmatpush1.msra.mxu0 0.0
        %344 = vmatprep.subr.mxu0 0.0
        %345 = vmatpush1.msra.mxu0 0.0
        %346 = vmatprep.subr.mxu0 0.0
        %347 = vmatpush1.msra.mxu0 0.0
        %348 = vmatprep.mubr.f32.mxu0 0.0
        %349 = vmatmul.mubr.f32.gmra.mrb[0].mxu0 %v212
        %v350 = vpop.f32.mrb[0].mxu0
        %v351 = vadd.f32 0.0, %v350
        %v352 = vpop.f32.mrb[0].mxu0
        %353 = vdwg.mxu0
        %354 = vmatprep.subr.mxu0 0.0
        %355 = vmatpush1.msra.mxu0 %v202
        %356 = vmatprep.subr.mxu0 0.0
        %357 = vmatpush1.msra.mxu0 %v203
        %358 = vmatprep.subr.mxu0 0.0
        %359 = vmatpush1.msra.mxu0 %v204
        %360 = vmatprep.subr.mxu0 0.0
        %361 = vmatpush1.msra.mxu0 %v205
        %362 = vmatprep.subr.mxu0 0.0
        %363 = vmatpush1.msra.mxu0 0.0
        %364 = vmatprep.subr.mxu0 0.0
        %365 = vmatpush1.msra.mxu0 0.0
        %366 = vmatprep.subr.mxu0 0.0
        %367 = vmatpush1.msra.mxu0 0.0
        %368 = vmatprep.subr.mxu0 0.0
        %369 = vmatpush1.msra.mxu0 0.0
        %370 = vmatprep.subr.mxu0 0.0
        %371 = vmatpush1.msra.mxu0 0.0
        %372 = vmatprep.subr.mxu0 0.0
        %373 = vmatpush1.msra.mxu0 0.0
        %374 = vmatprep.subr.mxu0 0.0
        %375 = vmatpush1.msra.mxu0 0.0
        %376 = vmatprep.subr.mxu0 0.0
        %377 = vmatpush1.msra.mxu0 0.0
        %378 = vmatprep.subr.mxu0 0.0
        %379 = vmatpush1.msra.mxu0 0.0
        %380 = vmatprep.subr.mxu0 0.0
        %381 = vmatpush1.msra.mxu0 0.0
        %382 = vmatprep.subr.mxu0 0.0
        %383 = vmatpush1.msra.mxu0 0.0
        %384 = vmatprep.subr.mxu0 0.0
        %385 = vmatpush1.msra.mxu0 0.0
        %386 = vmatprep.subr.mxu0 0.0
        %387 = vmatpush1.msra.mxu0 0.0
        %388 = vmatprep.subr.mxu0 0.0
        %389 = vmatpush1.msra.mxu0 0.0
        %390 = vmatprep.subr.mxu0 0.0
        %391 = vmatpush1.msra.mxu0 0.0
        %392 = vmatprep.subr.mxu0 0.0
        %393 = vmatpush1.msra.mxu0 0.0
        %394 = vmatprep.subr.mxu0 0.0
        %395 = vmatpush1.msra.mxu0 0.0
        %396 = vmatprep.subr.mxu0 0.0
        %397 = vmatpush1.msra.mxu0 0.0
        %398 = vmatprep.subr.mxu0 0.0
        %399 = vmatpush1.msra.mxu0 0.0
        %400 = vmatprep.subr.mxu0 0.0
        %401 = vmatpush1.msra.mxu0 0.0
        %402 = vmatprep.subr.mxu0 0.0
        %403 = vmatpush1.msra.mxu0 0.0
        %404 = vmatprep.subr.mxu0 0.0
        %405 = vmatpush1.msra.mxu0 0.0
        %406 = vmatprep.subr.mxu0 0.0
        %407 = vmatpush1.msra.mxu0 0.0
        %408 = vmatprep.subr.mxu0 0.0
        %409 = vmatpush1.msra.mxu0 0.0
        %410 = vmatprep.subr.mxu0 0.0
        %411 = vmatpush1.msra.mxu0 0.0
        %412 = vmatprep.subr.mxu0 0.0
        %413 = vmatpush1.msra.mxu0 0.0
        %414 = vmatprep.subr.mxu0 0.0
        %415 = vmatpush1.msra.mxu0 0.0
        %416 = vmatprep.subr.mxu0 0.0
        %417 = vmatpush1.msra.mxu0 0.0
        %418 = vmatprep.mubr.f32.mxu0 0.0
        %419 = vmatmul.mubr.f32.gmra.mrb[0].mxu0 %v212
        %v420 = vpop.f32.mrb[0].mxu0
        %v421 = vadd.f32 0.0, %v420
        %v422 = vpop.f32.mrb[0].mxu0
        %423 = vdwg.mxu0
        %424 = vmatprep.subr.mxu0 0.0
        %425 = vmatpush1.msra.mxu0 %v206
        %426 = vmatprep.subr.mxu0 0.0
        %427 = vmatpush1.msra.mxu0 %v207
        %428 = vmatprep.subr.mxu0 0.0
        %429 = vmatpush1.msra.mxu0 %v208
        %430 = vmatprep.subr.mxu0 0.0
        %431 = vmatpush1.msra.mxu0 %v209
        %432 = vmatprep.subr.mxu0 0.0
        %433 = vmatpush1.msra.mxu0 0.0
        %434 = vmatprep.subr.mxu0 0.0
        %435 = vmatpush1.msra.mxu0 0.0
        %436 = vmatprep.subr.mxu0 0.0
        %437 = vmatpush1.msra.mxu0 0.0
        %438 = vmatprep.subr.mxu0 0.0
        %439 = vmatpush1.msra.mxu0 0.0
        %440 = vmatprep.subr.mxu0 0.0
        %441 = vmatpush1.msra.mxu0 0.0
        %442 = vmatprep.subr.mxu0 0.0
        %443 = vmatpush1.msra.mxu0 0.0
        %444 = vmatprep.subr.mxu0 0.0
        %445 = vmatpush1.msra.mxu0 0.0
        %446 = vmatprep.subr.mxu0 0.0
        %447 = vmatpush1.msra.mxu0 0.0
        %448 = vmatprep.subr.mxu0 0.0
        %449 = vmatpush1.msra.mxu0 0.0
        %450 = vmatprep.subr.mxu0 0.0
        %451 = vmatpush1.msra.mxu0 0.0
        %452 = vmatprep.subr.mxu0 0.0
        %453 = vmatpush1.msra.mxu0 0.0
        %454 = vmatprep.subr.mxu0 0.0
        %455 = vmatpush1.msra.mxu0 0.0
        %456 = vmatprep.subr.mxu0 0.0
        %457 = vmatpush1.msra.mxu0 0.0
        %458 = vmatprep.subr.mxu0 0.0
        %459 = vmatpush1.msra.mxu0 0.0
        %460 = vmatprep.subr.mxu0 0.0
        %461 = vmatpush1.msra.mxu0 0.0
        %462 = vmatprep.subr.mxu0 0.0
        %463 = vmatpush1.msra.mxu0 0.0
        %464 = vmatprep.subr.mxu0 0.0
        %465 = vmatpush1.msra.mxu0 0.0
        %466 = vmatprep.subr.mxu0 0.0
        %467 = vmatpush1.msra.mxu0 0.0
        %468 = vmatprep.subr.mxu0 0.0
        %469 = vmatpush1.msra.mxu0 0.0
        %470 = vmatprep.subr.mxu0 0.0
        %471 = vmatpush1.msra.mxu0 0.0
        %472 = vmatprep.subr.mxu0 0.0
        %473 = vmatpush1.msra.mxu0 0.0
        %474 = vmatprep.subr.mxu0 0.0
        %475 = vmatpush1.msra.mxu0 0.0
        %476 = vmatprep.subr.mxu0 0.0
        %477 = vmatpush1.msra.mxu0 0.0
        %478 = vmatprep.subr.mxu0 0.0
        %479 = vmatpush1.msra.mxu0 0.0
        %480 = vmatprep.subr.mxu0 0.0
        %481 = vmatpush1.msra.mxu0 0.0
        %482 = vmatprep.subr.mxu0 0.0
        %483 = vmatpush1.msra.mxu0 0.0
        %484 = vmatprep.subr.mxu0 0.0
        %485 = vmatpush1.msra.mxu0 0.0
        %486 = vmatprep.subr.mxu0 0.0
        %487 = vmatpush1.msra.mxu0 0.0
        %488 = vmatprep.mubr.f32.mxu0 0.0
        %489 = vmatmul.mubr.f32.gmra.mrb[0].mxu0 %v212
        %v490 = vpop.f32.mrb[0].mxu0
        %v491 = vadd.f32 0.0, %v490
        %v492 = vpop.f32.mrb[0].mxu0
        %493 = vdwg.mxu0
        %495 = vrot.lane.b32.xlu0 %v281, 120
        %v496 = vpop.permute.xlu0 %495
        %vm497 = vcmask 64512
        %v498 = vsel %vm497, %v281, 0
        %v500 = vsel %vm497, %v496, 0
        %502 = vmatprep.subr.mxu0 0.0
        %503 = vmatpush1.xpose.msra.mxu0 %v500
        %504 = vmatprep.subr.mxu0 0.0
        %505 = vmatpush1.xpose.msra.mxu0 0.0
        %506 = vmatprep.subr.mxu0 0.0
        %507 = vmatpush1.xpose.msra.mxu0 0.0
        %508 = vmatprep.subr.mxu0 0.0
        %509 = vmatpush1.xpose.msra.mxu0 0.0
        %510 = vmatprep.subr.mxu0 0.0
        %511 = vmatpush1.xpose.msra.mxu0 0.0
        %512 = vmatprep.subr.mxu0 0.0
        %513 = vmatpush1.xpose.msra.mxu0 0.0
        %514 = vmatprep.subr.mxu0 0.0
        %515 = vmatpush1.xpose.msra.mxu0 0.0
        %516 = vmatprep.subr.mxu0 0.0
        %517 = vmatpush1.xpose.msra.mxu0 0.0
        %518 = vmatprep.subr.mxu0 0.0
        %519 = vmatpush1.xpose.msra.mxu0 0.0
        %520 = vmatprep.subr.mxu0 0.0
        %521 = vmatpush1.xpose.msra.mxu0 0.0
        %522 = vmatprep.subr.mxu0 0.0
        %523 = vmatpush1.xpose.msra.mxu0 0.0
        %524 = vmatprep.subr.mxu0 0.0
        %525 = vmatpush1.xpose.msra.mxu0 0.0
        %526 = vmatprep.subr.mxu0 0.0
        %527 = vmatpush1.xpose.msra.mxu0 0.0
        %528 = vmatprep.subr.mxu0 0.0
        %529 = vmatpush1.xpose.msra.mxu0 0.0
        %530 = vmatprep.subr.mxu0 0.0
        %531 = vmatpush1.xpose.msra.mxu0 0.0
        %532 = vmatprep.subr.mxu0 0.0
        %533 = vmatpush1.xpose.msra.mxu0 0.0
        %534 = vmatprep.subr.mxu0 0.0
        %535 = vmatpush1.xpose.msra.mxu0 0.0
        %536 = vmatprep.subr.mxu0 0.0
        %537 = vmatpush1.xpose.msra.mxu0 0.0
        %538 = vmatprep.subr.mxu0 0.0
        %539 = vmatpush1.xpose.msra.mxu0 0.0
        %540 = vmatprep.subr.mxu0 0.0
        %541 = vmatpush1.xpose.msra.mxu0 0.0
        %542 = vmatprep.subr.mxu0 0.0
        %543 = vmatpush1.xpose.msra.mxu0 0.0
        %544 = vmatprep.subr.mxu0 0.0
        %545 = vmatpush1.xpose.msra.mxu0 0.0
        %546 = vmatprep.subr.mxu0 0.0
        %547 = vmatpush1.xpose.msra.mxu0 0.0
        %548 = vmatprep.subr.mxu0 0.0
        %549 = vmatpush1.xpose.msra.mxu0 0.0
        %550 = vmatprep.subr.mxu0 0.0
        %551 = vmatpush1.xpose.msra.mxu0 0.0
        %552 = vmatprep.subr.mxu0 0.0
        %553 = vmatpush1.xpose.msra.mxu0 0.0
        %554 = vmatprep.subr.mxu0 0.0
        %555 = vmatpush1.xpose.msra.mxu0 0.0
        %556 = vmatprep.subr.mxu0 0.0
        %557 = vmatpush1.xpose.msra.mxu0 0.0
        %558 = vmatprep.subr.mxu0 0.0
        %559 = vmatpush1.xpose.msra.mxu0 0.0
        %560 = vmatprep.subr.mxu0 0.0
        %561 = vmatpush1.xpose.msra.mxu0 0.0
        %562 = vmatprep.subr.mxu0 0.0
        %563 = vmatpush1.xpose.msra.mxu0 0.0
        %564 = vmatprep.subr.mxu0 0.0
        %565 = vmatpush1.xpose.msra.mxu0 0.0
        %566 = vmatprep.mubr.f32.mxu0 0.0
        %567 = vmatmul.mubr.f32.gmra.mrb[0].mxu0 %v498
        %v568 = vpop.f32.mrb[0].mxu0
        %v569 = vadd.f32 0.0, %v568
        %v570 = vpop.f32.mrb[0].mxu0
        %571 = vdwg.mxu0
        %573 = vrot.lane.b32.xlu0 %v351, 120
        %v574 = vpop.permute.xlu0 %573
        %v575 = vsel %vm497, %v351, 0
        %v577 = vsel %vm497, %v574, 0
        %579 = vmatprep.subr.mxu0 0.0
        %580 = vmatpush1.xpose.msra.mxu0 %v577
        %581 = vmatprep.subr.mxu0 0.0
        %582 = vmatpush1.xpose.msra.mxu0 0.0
        %583 = vmatprep.subr.mxu0 0.0
        %584 = vmatpush1.xpose.msra.mxu0 0.0
        %585 = vmatprep.subr.mxu0 0.0
        %586 = vmatpush1.xpose.msra.mxu0 0.0
        %587 = vmatprep.subr.mxu0 0.0
        %588 = vmatpush1.xpose.msra.mxu0 0.0
        %589 = vmatprep.subr.mxu0 0.0
        %590 = vmatpush1.xpose.msra.mxu0 0.0
        %591 = vmatprep.subr.mxu0 0.0
        %592 = vmatpush1.xpose.msra.mxu0 0.0
        %593 = vmatprep.subr.mxu0 0.0
        %594 = vmatpush1.xpose.msra.mxu0 0.0
        %595 = vmatprep.subr.mxu0 0.0
        %596 = vmatpush1.xpose.msra.mxu0 0.0
        %597 = vmatprep.subr.mxu0 0.0
        %598 = vmatpush1.xpose.msra.mxu0 0.0
        %599 = vmatprep.subr.mxu0 0.0
        %600 = vmatpush1.xpose.msra.mxu0 0.0
        %601 = vmatprep.subr.mxu0 0.0
        %602 = vmatpush1.xpose.msra.mxu0 0.0
        %603 = vmatprep.subr.mxu0 0.0
        %604 = vmatpush1.xpose.msra.mxu0 0.0
        %605 = vmatprep.subr.mxu0 0.0
        %606 = vmatpush1.xpose.msra.mxu0 0.0
        %607 = vmatprep.subr.mxu0 0.0
        %608 = vmatpush1.xpose.msra.mxu0 0.0
        %609 = vmatprep.subr.mxu0 0.0
        %610 = vmatpush1.xpose.msra.mxu0 0.0
        %611 = vmatprep.subr.mxu0 0.0
        %612 = vmatpush1.xpose.msra.mxu0 0.0
        %613 = vmatprep.subr.mxu0 0.0
        %614 = vmatpush1.xpose.msra.mxu0 0.0
        %615 = vmatprep.subr.mxu0 0.0
        %616 = vmatpush1.xpose.msra.mxu0 0.0
        %617 = vmatprep.subr.mxu0 0.0
        %618 = vmatpush1.xpose.msra.mxu0 0.0
        %619 = vmatprep.subr.mxu0 0.0
        %620 = vmatpush1.xpose.msra.mxu0 0.0
        %621 = vmatprep.subr.mxu0 0.0
        %622 = vmatpush1.xpose.msra.mxu0 0.0
        %623 = vmatprep.subr.mxu0 0.0
        %624 = vmatpush1.xpose.msra.mxu0 0.0
        %625 = vmatprep.subr.mxu0 0.0
        %626 = vmatpush1.xpose.msra.mxu0 0.0
        %627 = vmatprep.subr.mxu0 0.0
        %628 = vmatpush1.xpose.msra.mxu0 0.0
        %629 = vmatprep.subr.mxu0 0.0
        %630 = vmatpush1.xpose.msra.mxu0 0.0
        %631 = vmatprep.subr.mxu0 0.0
        %632 = vmatpush1.xpose.msra.mxu0 0.0
        %633 = vmatprep.subr.mxu0 0.0
        %634 = vmatpush1.xpose.msra.mxu0 0.0
        %635 = vmatprep.subr.mxu0 0.0
        %636 = vmatpush1.xpose.msra.mxu0 0.0
        %637 = vmatprep.subr.mxu0 0.0
        %638 = vmatpush1.xpose.msra.mxu0 0.0
        %639 = vmatprep.subr.mxu0 0.0
        %640 = vmatpush1.xpose.msra.mxu0 0.0
        %641 = vmatprep.subr.mxu0 0.0
        %642 = vmatpush1.xpose.msra.mxu0 0.0
        %643 = vmatprep.mubr.f32.mxu0 0.0
        %644 = vmatmul.mubr.f32.gmra.mrb[0].mxu0 %v575
        %v645 = vpop.f32.mrb[0].mxu0
        %v646 = vadd.f32 0.0, %v645
        %v647 = vpop.f32.mrb[0].mxu0
        %648 = vdwg.mxu0
        %650 = vrot.lane.b32.xlu0 %v421, 120
        %v651 = vpop.permute.xlu0 %650
        %v652 = vsel %vm497, %v421, 0
        %v654 = vsel %vm497, %v651, 0
        %656 = vmatprep.subr.mxu0 0.0
        %657 = vmatpush1.xpose.msra.mxu0 %v654
        %658 = vmatprep.subr.mxu0 0.0
        %659 = vmatpush1.xpose.msra.mxu0 0.0
        %660 = vmatprep.subr.mxu0 0.0
        %661 = vmatpush1.xpose.msra.mxu0 0.0
        %662 = vmatprep.subr.mxu0 0.0
        %663 = vmatpush1.xpose.msra.mxu0 0.0
        %664 = vmatprep.subr.mxu0 0.0
        %665 = vmatpush1.xpose.msra.mxu0 0.0
        %666 = vmatprep.subr.mxu0 0.0
        %667 = vmatpush1.xpose.msra.mxu0 0.0
        %668 = vmatprep.subr.mxu0 0.0
        %669 = vmatpush1.xpose.msra.mxu0 0.0
        %670 = vmatprep.subr.mxu0 0.0
        %671 = vmatpush1.xpose.msra.mxu0 0.0
        %672 = vmatprep.subr.mxu0 0.0
        %673 = vmatpush1.xpose.msra.mxu0 0.0
        %674 = vmatprep.subr.mxu0 0.0
        %675 = vmatpush1.xpose.msra.mxu0 0.0
        %676 = vmatprep.subr.mxu0 0.0
        %677 = vmatpush1.xpose.msra.mxu0 0.0
        %678 = vmatprep.subr.mxu0 0.0
        %679 = vmatpush1.xpose.msra.mxu0 0.0
        %680 = vmatprep.subr.mxu0 0.0
        %681 = vmatpush1.xpose.msra.mxu0 0.0
        %682 = vmatprep.subr.mxu0 0.0
        %683 = vmatpush1.xpose.msra.mxu0 0.0
        %684 = vmatprep.subr.mxu0 0.0
        %685 = vmatpush1.xpose.msra.mxu0 0.0
        %686 = vmatprep.subr.mxu0 0.0
        %687 = vmatpush1.xpose.msra.mxu0 0.0
        %688 = vmatprep.subr.mxu0 0.0
        %689 = vmatpush1.xpose.msra.mxu0 0.0
        %690 = vmatprep.subr.mxu0 0.0
        %691 = vmatpush1.xpose.msra.mxu0 0.0
        %692 = vmatprep.subr.mxu0 0.0
        %693 = vmatpush1.xpose.msra.mxu0 0.0
        %694 = vmatprep.subr.mxu0 0.0
        %695 = vmatpush1.xpose.msra.mxu0 0.0
        %696 = vmatprep.subr.mxu0 0.0
        %697 = vmatpush1.xpose.msra.mxu0 0.0
        %698 = vmatprep.subr.mxu0 0.0
        %699 = vmatpush1.xpose.msra.mxu0 0.0
        %700 = vmatprep.subr.mxu0 0.0
        %701 = vmatpush1.xpose.msra.mxu0 0.0
        %702 = vmatprep.subr.mxu0 0.0
        %703 = vmatpush1.xpose.msra.mxu0 0.0
        %704 = vmatprep.subr.mxu0 0.0
        %705 = vmatpush1.xpose.msra.mxu0 0.0
        %706 = vmatprep.subr.mxu0 0.0
        %707 = vmatpush1.xpose.msra.mxu0 0.0
        %708 = vmatprep.subr.mxu0 0.0
        %709 = vmatpush1.xpose.msra.mxu0 0.0
        %710 = vmatprep.subr.mxu0 0.0
        %711 = vmatpush1.xpose.msra.mxu0 0.0
        %712 = vmatprep.subr.mxu0 0.0
        %713 = vmatpush1.xpose.msra.mxu0 0.0
        %714 = vmatprep.subr.mxu0 0.0
        %715 = vmatpush1.xpose.msra.mxu0 0.0
        %716 = vmatprep.subr.mxu0 0.0
        %717 = vmatpush1.xpose.msra.mxu0 0.0
        %718 = vmatprep.subr.mxu0 0.0
        %719 = vmatpush1.xpose.msra.mxu0 0.0
        %720 = vmatprep.mubr.f32.mxu0 0.0
        %721 = vmatmul.mubr.f32.gmra.mrb[0].mxu0 %v652
        %v722 = vpop.f32.mrb[0].mxu0
        %v723 = vadd.f32 0.0, %v722
        %v724 = vpop.f32.mrb[0].mxu0
        %725 = vdwg.mxu0
        %727 = vrot.lane.b32.xlu0 %v491, 120
        %v728 = vpop.permute.xlu0 %727
        %v729 = vsel %vm497, %v491, 0
        %v731 = vsel %vm497, %v728, 0
        %733 = vmatprep.subr.mxu0 0.0
        %734 = vmatpush1.xpose.msra.mxu0 %v731
        %735 = vmatprep.subr.mxu0 0.0
        %736 = vmatpush1.xpose.msra.mxu0 0.0
        %737 = vmatprep.subr.mxu0 0.0
        %738 = vmatpush1.xpose.msra.mxu0 0.0
        %739 = vmatprep.subr.mxu0 0.0
        %740 = vmatpush1.xpose.msra.mxu0 0.0
        %741 = vmatprep.subr.mxu0 0.0
        %742 = vmatpush1.xpose.msra.mxu0 0.0
        %743 = vmatprep.subr.mxu0 0.0
        %744 = vmatpush1.xpose.msra.mxu0 0.0
        %745 = vmatprep.subr.mxu0 0.0
        %746 = vmatpush1.xpose.msra.mxu0 0.0
        %747 = vmatprep.subr.mxu0 0.0
        %748 = vmatpush1.xpose.msra.mxu0 0.0
        %749 = vmatprep.subr.mxu0 0.0
        %750 = vmatpush1.xpose.msra.mxu0 0.0
        %751 = vmatprep.subr.mxu0 0.0
        %752 = vmatpush1.xpose.msra.mxu0 0.0
        %753 = vmatprep.subr.mxu0 0.0
        %754 = vmatpush1.xpose.msra.mxu0 0.0
        %755 = vmatprep.subr.mxu0 0.0
        %756 = vmatpush1.xpose.msra.mxu0 0.0
        %757 = vmatprep.subr.mxu0 0.0
        %758 = vmatpush1.xpose.msra.mxu0 0.0
        %759 = vmatprep.subr.mxu0 0.0
        %760 = vmatpush1.xpose.msra.mxu0 0.0
        %761 = vmatprep.subr.mxu0 0.0
        %762 = vmatpush1.xpose.msra.mxu0 0.0
        %763 = vmatprep.subr.mxu0 0.0
        %764 = vmatpush1.xpose.msra.mxu0 0.0
        %765 = vmatprep.subr.mxu0 0.0
        %766 = vmatpush1.xpose.msra.mxu0 0.0
        %767 = vmatprep.subr.mxu0 0.0
        %768 = vmatpush1.xpose.msra.mxu0 0.0
        %769 = vmatprep.subr.mxu0 0.0
        %770 = vmatpush1.xpose.msra.mxu0 0.0
        %771 = vmatprep.subr.mxu0 0.0
        %772 = vmatpush1.xpose.msra.mxu0 0.0
        %773 = vmatprep.subr.mxu0 0.0
        %774 = vmatpush1.xpose.msra.mxu0 0.0
        %775 = vmatprep.subr.mxu0 0.0
        %776 = vmatpush1.xpose.msra.mxu0 0.0
        %777 = vmatprep.subr.mxu0 0.0
        %778 = vmatpush1.xpose.msra.mxu0 0.0
        %779 = vmatprep.subr.mxu0 0.0
        %780 = vmatpush1.xpose.msra.mxu0 0.0
        %781 = vmatprep.subr.mxu0 0.0
        %782 = vmatpush1.xpose.msra.mxu0 0.0
        %783 = vmatprep.subr.mxu0 0.0
        %784 = vmatpush1.xpose.msra.mxu0 0.0
        %785 = vmatprep.subr.mxu0 0.0
        %786 = vmatpush1.xpose.msra.mxu0 0.0
        %787 = vmatprep.subr.mxu0 0.0
        %788 = vmatpush1.xpose.msra.mxu0 0.0
        %789 = vmatprep.subr.mxu0 0.0
        %790 = vmatpush1.xpose.msra.mxu0 0.0
        %791 = vmatprep.subr.mxu0 0.0
        %792 = vmatpush1.xpose.msra.mxu0 0.0
        %793 = vmatprep.subr.mxu0 0.0
        %794 = vmatpush1.xpose.msra.mxu0 0.0
        %795 = vmatprep.subr.mxu0 0.0
        %796 = vmatpush1.xpose.msra.mxu0 0.0
        %797 = vmatprep.mubr.f32.mxu0 0.0
        %798 = vmatmul.mubr.f32.gmra.mrb[0].mxu0 %v729
        %v799 = vpop.f32.mrb[0].mxu0
        %v800 = vadd.f32 0.0, %v799
        %v801 = vpop.f32.mrb[0].mxu0
        %802 = vdwg.mxu0
        %v803 = vmul.f32 %v569, 0.35355338
        %v804 = vmul.f32 %v646, 0.35355338
        %v805 = vmul.f32 %v723, 0.35355338
        %v806 = vmul.f32 %v800, 0.35355338
        %v807 = vsel %vm497, %v803, -inf
        %808 = vmax.xlane.f32.xlu0 %v807
        %v809 = vpop.xlane.xlu0 %808
        %v810 = vsel %vm497, %v804, -inf
        %811 = vmax.xlane.f32.xlu0 %v810
        %v812 = vpop.xlane.xlu0 %811
        %v813 = vsel %vm497, %v805, -inf
        %814 = vmax.xlane.f32.xlu0 %v813
        %v815 = vpop.xlane.xlu0 %814
        %v816 = vsel %vm497, %v806, -inf
        %817 = vmax.xlane.f32.xlu0 %v816
        %v818 = vpop.xlane.xlu0 %817
        %v819 = vsub.f32 %v803, %v809
        %v820 = vsub.f32 %v804, %v812
        %v821 = vsub.f32 %v805, %v815
        %v822 = vsub.f32 %v806, %v818
        %v823 = vmul.f32 %v819, 1.442695
        %v824 = vpow.pop %v823
        %v825 = vmul.f32 %v820, 1.442695
        %v826 = vpow.pop %v825
        %v827 = vmul.f32 %v821, 1.442695
        %v828 = vpow.pop %v827
        %v829 = vmul.f32 %v822, 1.442695
        %v830 = vpow.pop %v829
        %v831 = vsel %vm497, %v824, 0.0
        %832 = vadd.xlane.f32.xlu0 %v831
        %v833 = vpop.xlane.xlu0 %832
        %v834 = vsel %vm497, %v826, 0.0
        %835 = vadd.xlane.f32.xlu0 %v834
        %v836 = vpop.xlane.xlu0 %835
        %v837 = vsel %vm497, %v828, 0.0
        %838 = vadd.xlane.f32.xlu0 %v837
        %v839 = vpop.xlane.xlu0 %838
        %v840 = vsel %vm497, %v830, 0.0
        %841 = vadd.xlane.f32.xlu0 %v840
        %v842 = vpop.xlane.xlu0 %841
        %v843 = vrcp.pop %v833
        %v844 = vrcp.pop %v836
        %v845 = vrcp.pop %v839
        %v846 = vrcp.pop %v842
        %v847 = vmul.f32 %v824, %v843
        %v848 = vmul.f32 %v826, %v844
        %v849 = vmul.f32 %v828, %v845
        %v850 = vmul.f32 %v830, %v846
        %851 = vrot.lane.b32.xlu0 %v281, 112
        %v852 = vpop.permute.xlu0 %851
        %v855 = vsel %vm497, %v847, 0
        %857 = vmatprep.subr.mxu0 0.0
        %858 = vmatpush1.msra.mxu0 %v852
        %859 = vmatprep.subr.mxu0 0.0
        %860 = vmatpush1.msra.mxu0 0.0
        %861 = vmatprep.subr.mxu0 0.0
        %862 = vmatpush1.msra.mxu0 0.0
        %863 = vmatprep.subr.mxu0 0.0
        %864 = vmatpush1.msra.mxu0 0.0
        %865 = vmatprep.subr.mxu0 0.0
        %866 = vmatpush1.msra.mxu0 0.0
        %867 = vmatprep.subr.mxu0 0.0
        %868 = vmatpush1.msra.mxu0 0.0
        %869 = vmatprep.subr.mxu0 0.0
        %870 = vmatpush1.msra.mxu0 0.0
        %871 = vmatprep.subr.mxu0 0.0
        %872 = vmatpush1.msra.mxu0 0.0
        %873 = vmatprep.subr.mxu0 0.0
        %874 = vmatpush1.msra.mxu0 0.0
        %875 = vmatprep.subr.mxu0 0.0
        %876 = vmatpush1.msra.mxu0 0.0
        %877 = vmatprep.subr.mxu0 0.0
        %878 = vmatpush1.msra.mxu0 0.0
        %879 = vmatprep.subr.mxu0 0.0
        %880 = vmatpush1.msra.mxu0 0.0
        %881 = vmatprep.subr.mxu0 0.0
        %882 = vmatpush1.msra.mxu0 0.0
        %883 = vmatprep.subr.mxu0 0.0
        %884 = vmatpush1.msra.mxu0 0.0
        %885 = vmatprep.subr.mxu0 0.0
        %886 = vmatpush1.msra.mxu0 0.0
        %887 = vmatprep.subr.mxu0 0.0
        %888 = vmatpush1.msra.mxu0 0.0
        %889 = vmatprep.subr.mxu0 0.0
        %890 = vmatpush1.msra.mxu0 0.0
        %891 = vmatprep.subr.mxu0 0.0
        %892 = vmatpush1.msra.mxu0 0.0
        %893 = vmatprep.subr.mxu0 0.0
        %894 = vmatpush1.msra.mxu0 0.0
        %895 = vmatprep.subr.mxu0 0.0
        %896 = vmatpush1.msra.mxu0 0.0
        %897 = vmatprep.subr.mxu0 0.0
        %898 = vmatpush1.msra.mxu0 0.0
        %899 = vmatprep.subr.mxu0 0.0
        %900 = vmatpush1.msra.mxu0 0.0
        %901 = vmatprep.subr.mxu0 0.0
        %902 = vmatpush1.msra.mxu0 0.0
        %903 = vmatprep.subr.mxu0 0.0
        %904 = vmatpush1.msra.mxu0 0.0
        %905 = vmatprep.subr.mxu0 0.0
        %906 = vmatpush1.msra.mxu0 0.0
        %907 = vmatprep.subr.mxu0 0.0
        %908 = vmatpush1.msra.mxu0 0.0
        %909 = vmatprep.subr.mxu0 0.0
        %910 = vmatpush1.msra.mxu0 0.0
        %911 = vmatprep.subr.mxu0 0.0
        %912 = vmatpush1.msra.mxu0 0.0
        %913 = vmatprep.subr.mxu0 0.0
        %914 = vmatpush1.msra.mxu0 0.0
        %915 = vmatprep.subr.mxu0 0.0
        %916 = vmatpush1.msra.mxu0 0.0
        %917 = vmatprep.subr.mxu0 0.0
        %918 = vmatpush1.msra.mxu0 0.0
        %919 = vmatprep.subr.mxu0 0.0
        %920 = vmatpush1.msra.mxu0 0.0
        %921 = vmatprep.mubr.f32.mxu0 0.0
        %922 = vmatmul.mubr.f32.gmra.mrb[0].mxu0 %v855
        %v923 = vpop.f32.mrb[0].mxu0
        %v924 = vadd.f32 0.0, %v923
        %v925 = vpop.f32.mrb[0].mxu0
        %926 = vdwg.mxu0
        %927 = vrot.lane.b32.xlu0 %v351, 112
        %v928 = vpop.permute.xlu0 %927
        %v931 = vsel %vm497, %v848, 0
        %933 = vmatprep.subr.mxu0 0.0
        %934 = vmatpush1.msra.mxu0 %v928
        %935 = vmatprep.subr.mxu0 0.0
        %936 = vmatpush1.msra.mxu0 0.0
        %937 = vmatprep.subr.mxu0 0.0
        %938 = vmatpush1.msra.mxu0 0.0
        %939 = vmatprep.subr.mxu0 0.0
        %940 = vmatpush1.msra.mxu0 0.0
        %941 = vmatprep.subr.mxu0 0.0
        %942 = vmatpush1.msra.mxu0 0.0
        %943 = vmatprep.subr.mxu0 0.0
        %944 = vmatpush1.msra.mxu0 0.0
        %945 = vmatprep.subr.mxu0 0.0
        %946 = vmatpush1.msra.mxu0 0.0
        %947 = vmatprep.subr.mxu0 0.0
        %948 = vmatpush1.msra.mxu0 0.0
        %949 = vmatprep.subr.mxu0 0.0
        %950 = vmatpush1.msra.mxu0 0.0
        %951 = vmatprep.subr.mxu0 0.0
        %952 = vmatpush1.msra.mxu0 0.0
        %953 = vmatprep.subr.mxu0 0.0
        %954 = vmatpush1.msra.mxu0 0.0
        %955 = vmatprep.subr.mxu0 0.0
        %956 = vmatpush1.msra.mxu0 0.0
        %957 = vmatprep.subr.mxu0 0.0
        %958 = vmatpush1.msra.mxu0 0.0
        %959 = vmatprep.subr.mxu0 0.0
        %960 = vmatpush1.msra.mxu0 0.0
        %961 = vmatprep.subr.mxu0 0.0
        %962 = vmatpush1.msra.mxu0 0.0
        %963 = vmatprep.subr.mxu0 0.0
        %964 = vmatpush1.msra.mxu0 0.0
        %965 = vmatprep.subr.mxu0 0.0
        %966 = vmatpush1.msra.mxu0 0.0
        %967 = vmatprep.subr.mxu0 0.0
        %968 = vmatpush1.msra.mxu0 0.0
        %969 = vmatprep.subr.mxu0 0.0
        %970 = vmatpush1.msra.mxu0 0.0
        %971 = vmatprep.subr.mxu0 0.0
        %972 = vmatpush1.msra.mxu0 0.0
        %973 = vmatprep.subr.mxu0 0.0
        %974 = vmatpush1.msra.mxu0 0.0
        %975 = vmatprep.subr.mxu0 0.0
        %976 = vmatpush1.msra.mxu0 0.0
        %977 = vmatprep.subr.mxu0 0.0
        %978 = vmatpush1.msra.mxu0 0.0
        %979 = vmatprep.subr.mxu0 0.0
        %980 = vmatpush1.msra.mxu0 0.0
        %981 = vmatprep.subr.mxu0 0.0
        %982 = vmatpush1.msra.mxu0 0.0
        %983 = vmatprep.subr.mxu0 0.0
        %984 = vmatpush1.msra.mxu0 0.0
        %985 = vmatprep.subr.mxu0 0.0
        %986 = vmatpush1.msra.mxu0 0.0
        %987 = vmatprep.subr.mxu0 0.0
        %988 = vmatpush1.msra.mxu0 0.0
        %989 = vmatprep.subr.mxu0 0.0
        %990 = vmatpush1.msra.mxu0 0.0
        %991 = vmatprep.subr.mxu0 0.0
        %992 = vmatpush1.msra.mxu0 0.0
        %993 = vmatprep.subr.mxu0 0.0
        %994 = vmatpush1.msra.mxu0 0.0
        %995 = vmatprep.subr.mxu0 0.0
        %996 = vmatpush1.msra.mxu0 0.0
        %997 = vmatprep.mubr.f32.mxu0 0.0
        %998 = vmatmul.mubr.f32.gmra.mrb[0].mxu0 %v931
        %v999 = vpop.f32.mrb[0].mxu0
        %v1000 = vadd.f32 0.0, %v999
        %v1001 = vpop.f32.mrb[0].mxu0
        %1002 = vdwg.mxu0
        %1003 = vrot.lane.b32.xlu0 %v421, 112
        %v1004 = vpop.permute.xlu0 %1003
        %v1007 = vsel %vm497, %v849, 0
        %1009 = vmatprep.subr.mxu0 0.0
        %1010 = vmatpush1.msra.mxu0 %v1004
        %1011 = vmatprep.subr.mxu0 0.0
        %1012 = vmatpush1.msra.mxu0 0.0
        %1013 = vmatprep.subr.mxu0 0.0
        %1014 = vmatpush1.msra.mxu0 0.0
        %1015 = vmatprep.subr.mxu0 0.0
        %1016 = vmatpush1.msra.mxu0 0.0
        %1017 = vmatprep.subr.mxu0 0.0
        %1018 = vmatpush1.msra.mxu0 0.0
        %1019 = vmatprep.subr.mxu0 0.0
        %1020 = vmatpush1.msra.mxu0 0.0
        %1021 = vmatprep.subr.mxu0 0.0
        %1022 = vmatpush1.msra.mxu0 0.0
        %1023 = vmatprep.subr.mxu0 0.0
        %1024 = vmatpush1.msra.mxu0 0.0
        %1025 = vmatprep.subr.mxu0 0.0
        %1026 = vmatpush1.msra.mxu0 0.0
        %1027 = vmatprep.subr.mxu0 0.0
        %1028 = vmatpush1.msra.mxu0 0.0
        %1029 = vmatprep.subr.mxu0 0.0
        %1030 = vmatpush1.msra.mxu0 0.0
        %1031 = vmatprep.subr.mxu0 0.0
        %1032 = vmatpush1.msra.mxu0 0.0
        %1033 = vmatprep.subr.mxu0 0.0
        %1034 = vmatpush1.msra.mxu0 0.0
        %1035 = vmatprep.subr.mxu0 0.0
        %1036 = vmatpush1.msra.mxu0 0.0
        %1037 = vmatprep.subr.mxu0 0.0
        %1038 = vmatpush1.msra.mxu0 0.0
        %1039 = vmatprep.subr.mxu0 0.0
        %1040 = vmatpush1.msra.mxu0 0.0
        %1041 = vmatprep.subr.mxu0 0.0
        %1042 = vmatpush1.msra.mxu0 0.0
        %1043 = vmatprep.subr.mxu0 0.0
        %1044 = vmatpush1.msra.mxu0 0.0
        %1045 = vmatprep.subr.mxu0 0.0
        %1046 = vmatpush1.msra.mxu0 0.0
        %1047 = vmatprep.subr.mxu0 0.0
        %1048 = vmatpush1.msra.mxu0 0.0
        %1049 = vmatprep.subr.mxu0 0.0
        %1050 = vmatpush1.msra.mxu0 0.0
        %1051 = vmatprep.subr.mxu0 0.0
        %1052 = vmatpush1.msra.mxu0 0.0
        %1053 = vmatprep.subr.mxu0 0.0
        %1054 = vmatpush1.msra.mxu0 0.0
        %1055 = vmatprep.subr.mxu0 0.0
        %1056 = vmatpush1.msra.mxu0 0.0
        %1057 = vmatprep.subr.mxu0 0.0
        %1058 = vmatpush1.msra.mxu0 0.0
        %1059 = vmatprep.subr.mxu0 0.0
        %1060 = vmatpush1.msra.mxu0 0.0
        %1061 = vmatprep.subr.mxu0 0.0
        %1062 = vmatpush1.msra.mxu0 0.0
        %1063 = vmatprep.subr.mxu0 0.0
        %1064 = vmatpush1.msra.mxu0 0.0
        %1065 = vmatprep.subr.mxu0 0.0
        %1066 = vmatpush1.msra.mxu0 0.0
        %1067 = vmatprep.subr.mxu0 0.0
        %1068 = vmatpush1.msra.mxu0 0.0
        %1069 = vmatprep.subr.mxu0 0.0
        %1070 = vmatpush1.msra.mxu0 0.0
        %1071 = vmatprep.subr.mxu0 0.0
        %1072 = vmatpush1.msra.mxu0 0.0
        %1073 = vmatprep.mubr.f32.mxu0 0.0
        %1074 = vmatmul.mubr.f32.gmra.mrb[0].mxu0 %v1007
        %v1075 = vpop.f32.mrb[0].mxu0
        %v1076 = vadd.f32 0.0, %v1075
        %v1077 = vpop.f32.mrb[0].mxu0
        %1078 = vdwg.mxu0
        %1079 = vrot.lane.b32.xlu0 %v491, 112
        %v1080 = vpop.permute.xlu0 %1079
        %v1083 = vsel %vm497, %v850, 0
        %1085 = vmatprep.subr.mxu0 0.0
        %1086 = vmatpush1.msra.mxu0 %v1080
        %1087 = vmatprep.subr.mxu0 0.0
        %1088 = vmatpush1.msra.mxu0 0.0
        %1089 = vmatprep.subr.mxu0 0.0
        %1090 = vmatpush1.msra.mxu0 0.0
        %1091 = vmatprep.subr.mxu0 0.0
        %1092 = vmatpush1.msra.mxu0 0.0
        %1093 = vmatprep.subr.mxu0 0.0
        %1094 = vmatpush1.msra.mxu0 0.0
        %1095 = vmatprep.subr.mxu0 0.0
        %1096 = vmatpush1.msra.mxu0 0.0
        %1097 = vmatprep.subr.mxu0 0.0
        %1098 = vmatpush1.msra.mxu0 0.0
        %1099 = vmatprep.subr.mxu0 0.0
        %1100 = vmatpush1.msra.mxu0 0.0
        %1101 = vmatprep.subr.mxu0 0.0
        %1102 = vmatpush1.msra.mxu0 0.0
        %1103 = vmatprep.subr.mxu0 0.0
        %1104 = vmatpush1.msra.mxu0 0.0
        %1105 = vmatprep.subr.mxu0 0.0
        %1106 = vmatpush1.msra.mxu0 0.0
        %1107 = vmatprep.subr.mxu0 0.0
        %1108 = vmatpush1.msra.mxu0 0.0
        %1109 = vmatprep.subr.mxu0 0.0
        %1110 = vmatpush1.msra.mxu0 0.0
        %1111 = vmatprep.subr.mxu0 0.0
        %1112 = vmatpush1.msra.mxu0 0.0
        %1113 = vmatprep.subr.mxu0 0.0
        %1114 = vmatpush1.msra.mxu0 0.0
        %1115 = vmatprep.subr.mxu0 0.0
        %1116 = vmatpush1.msra.mxu0 0.0
        %1117 = vmatprep.subr.mxu0 0.0
        %1118 = vmatpush1.msra.mxu0 0.0
        %1119 = vmatprep.subr.mxu0 0.0
        %1120 = vmatpush1.msra.mxu0 0.0
        %1121 = vmatprep.subr.mxu0 0.0
        %1122 = vmatpush1.msra.mxu0 0.0
        %1123 = vmatprep.subr.mxu0 0.0
        %1124 = vmatpush1.msra.mxu0 0.0
        %1125 = vmatprep.subr.mxu0 0.0
        %1126 = vmatpush1.msra.mxu0 0.0
        %1127 = vmatprep.subr.mxu0 0.0
        %1128 = vmatpush1.msra.mxu0 0.0
        %1129 = vmatprep.subr.mxu0 0.0
        %1130 = vmatpush1.msra.mxu0 0.0
        %1131 = vmatprep.subr.mxu0 0.0
        %1132 = vmatpush1.msra.mxu0 0.0
        %1133 = vmatprep.subr.mxu0 0.0
        %1134 = vmatpush1.msra.mxu0 0.0
        %1135 = vmatprep.subr.mxu0 0.0
        %1136 = vmatpush1.msra.mxu0 0.0
        %1137 = vmatprep.subr.mxu0 0.0
        %1138 = vmatpush1.msra.mxu0 0.0
        %1139 = vmatprep.subr.mxu0 0.0
        %1140 = vmatpush1.msra.mxu0 0.0
        %1141 = vmatprep.subr.mxu0 0.0
        %1142 = vmatpush1.msra.mxu0 0.0
        %1143 = vmatprep.subr.mxu0 0.0
        %1144 = vmatpush1.msra.mxu0 0.0
        %1145 = vmatprep.subr.mxu0 0.0
        %1146 = vmatpush1.msra.mxu0 0.0
        %1147 = vmatprep.subr.mxu0 0.0
        %1148 = vmatpush1.msra.mxu0 0.0
        %1149 = vmatprep.mubr.f32.mxu0 0.0
        %1150 = vmatmul.mubr.f32.gmra.mrb[0].mxu0 %v1083
        %v1151 = vpop.f32.mrb[0].mxu0
        %v1152 = vadd.f32 0.0, %v1151
        %v1153 = vpop.f32.mrb[0].mxu0
        %1154 = vdwg.mxu0
        %v1155 = vld [vmem:[%s2] sm:$0xff]
        %v1156 = vld [vmem:[%s2 + $0x8] sm:$0xff]
        %v1157 = vld [vmem:[%s2 + $0x10] sm:$0xff]
        %v1158 = vld [vmem:[%s2 + $0x18] sm:$0xff]
        %v1159 = vld [vmem:[%s3] sm:$0x1]
        %v1161 = vrot.slane %v924, 2
        %v1162 = vsel %vm497, %v1161, 0
        %1164 = vmatprep.subr.mxu0 0.0
        %1165 = vmatpush1.msra.mxu0 %v1156
        %1166 = vmatprep.subr.mxu0 0.0
        %1167 = vmatpush1.msra.mxu0 0.0
        %1168 = vmatprep.subr.mxu0 0.0
        %1169 = vmatpush1.msra.mxu0 0.0
        %1170 = vmatprep.subr.mxu0 0.0
        %1171 = vmatpush1.msra.mxu0 0.0
        %1172 = vmatprep.subr.mxu0 0.0
        %1173 = vmatpush1.msra.mxu0 0.0
        %1174 = vmatprep.subr.mxu0 0.0
        %1175 = vmatpush1.msra.mxu0 0.0
        %1176 = vmatprep.subr.mxu0 0.0
        %1177 = vmatpush1.msra.mxu0 0.0
        %1178 = vmatprep.subr.mxu0 0.0
        %1179 = vmatpush1.msra.mxu0 0.0
        %1180 = vmatprep.subr.mxu0 0.0
        %1181 = vmatpush1.msra.mxu0 0.0
        %1182 = vmatprep.subr.mxu0 0.0
        %1183 = vmatpush1.msra.mxu0 0.0
        %1184 = vmatprep.subr.mxu0 0.0
        %1185 = vmatpush1.msra.mxu0 0.0
        %1186 = vmatprep.subr.mxu0 0.0
        %1187 = vmatpush1.msra.mxu0 0.0
        %1188 = vmatprep.subr.mxu0 0.0
        %1189 = vmatpush1.msra.mxu0 0.0
        %1190 = vmatprep.subr.mxu0 0.0
        %1191 = vmatpush1.msra.mxu0 0.0
        %1192 = vmatprep.subr.mxu0 0.0
        %1193 = vmatpush1.msra.mxu0 0.0
        %1194 = vmatprep.subr.mxu0 0.0
        %1195 = vmatpush1.msra.mxu0 0.0
        %1196 = vmatprep.subr.mxu0 0.0
        %1197 = vmatpush1.msra.mxu0 0.0
        %1198 = vmatprep.subr.mxu0 0.0
        %1199 = vmatpush1.msra.mxu0 0.0
        %1200 = vmatprep.subr.mxu0 0.0
        %1201 = vmatpush1.msra.mxu0 0.0
        %1202 = vmatprep.subr.mxu0 0.0
        %1203 = vmatpush1.msra.mxu0 0.0
        %1204 = vmatprep.subr.mxu0 0.0
        %1205 = vmatpush1.msra.mxu0 0.0
        %1206 = vmatprep.subr.mxu0 0.0
        %1207 = vmatpush1.msra.mxu0 0.0
        %1208 = vmatprep.subr.mxu0 0.0
        %1209 = vmatpush1.msra.mxu0 0.0
        %1210 = vmatprep.subr.mxu0 0.0
        %1211 = vmatpush1.msra.mxu0 0.0
        %1212 = vmatprep.subr.mxu0 0.0
        %1213 = vmatpush1.msra.mxu0 0.0
        %1214 = vmatprep.subr.mxu0 0.0
        %1215 = vmatpush1.msra.mxu0 0.0
        %1216 = vmatprep.subr.mxu0 0.0
        %1217 = vmatpush1.msra.mxu0 0.0
        %1218 = vmatprep.subr.mxu0 0.0
        %1219 = vmatpush1.msra.mxu0 0.0
        %1220 = vmatprep.subr.mxu0 0.0
        %1221 = vmatpush1.msra.mxu0 0.0
        %1222 = vmatprep.subr.mxu0 0.0
        %1223 = vmatpush1.msra.mxu0 0.0
        %1224 = vmatprep.subr.mxu0 0.0
        %1225 = vmatpush1.msra.mxu0 0.0
        %1226 = vmatprep.subr.mxu0 0.0
        %1227 = vmatpush1.msra.mxu0 0.0
        %1228 = vmatprep.mubr.f32.mxu0 0.0
        %1229 = vmatmul.mubr.f32.gmra.mrb[0].mxu0 %v1162
        %v1230 = vpop.f32.mrb[0].mxu0
        %v1231 = vadd.f32 0.0, %v1230
        %v1232 = vpop.f32.mrb[0].mxu0
        %1233 = vdwg.mxu0
        %v1234 = vsel %vm497, %v924, 0
        %1236 = vmatprep.subr.mxu0 0.0
        %1237 = vmatpush1.msra.mxu0 %v1155
        %1238 = vmatprep.subr.mxu0 0.0
        %1239 = vmatpush1.msra.mxu0 0.0
        %1240 = vmatprep.subr.mxu0 0.0
        %1241 = vmatpush1.msra.mxu0 0.0
        %1242 = vmatprep.subr.mxu0 0.0
        %1243 = vmatpush1.msra.mxu0 0.0
        %1244 = vmatprep.subr.mxu0 0.0
        %1245 = vmatpush1.msra.mxu0 0.0
        %1246 = vmatprep.subr.mxu0 0.0
        %1247 = vmatpush1.msra.mxu0 0.0
        %1248 = vmatprep.subr.mxu0 0.0
        %1249 = vmatpush1.msra.mxu0 0.0
        %1250 = vmatprep.subr.mxu0 0.0
        %1251 = vmatpush1.msra.mxu0 0.0
        %1252 = vmatprep.subr.mxu0 0.0
        %1253 = vmatpush1.msra.mxu0 0.0
        %1254 = vmatprep.subr.mxu0 0.0
        %1255 = vmatpush1.msra.mxu0 0.0
        %1256 = vmatprep.subr.mxu0 0.0
        %1257 = vmatpush1.msra.mxu0 0.0
        %1258 = vmatprep.subr.mxu0 0.0
        %1259 = vmatpush1.msra.mxu0 0.0
        %1260 = vmatprep.subr.mxu0 0.0
        %1261 = vmatpush1.msra.mxu0 0.0
        %1262 = vmatprep.subr.mxu0 0.0
        %1263 = vmatpush1.msra.mxu0 0.0
        %1264 = vmatprep.subr.mxu0 0.0
        %1265 = vmatpush1.msra.mxu0 0.0
        %1266 = vmatprep.subr.mxu0 0.0
        %1267 = vmatpush1.msra.mxu0 0.0
        %1268 = vmatprep.subr.mxu0 0.0
        %1269 = vmatpush1.msra.mxu0 0.0
        %1270 = vmatprep.subr.mxu0 0.0
        %1271 = vmatpush1.msra.mxu0 0.0
        %1272 = vmatprep.subr.mxu0 0.0
        %1273 = vmatpush1.msra.mxu0 0.0
        %1274 = vmatprep.subr.mxu0 0.0
        %1275 = vmatpush1.msra.mxu0 0.0
        %1276 = vmatprep.subr.mxu0 0.0
        %1277 = vmatpush1.msra.mxu0 0.0
        %1278 = vmatprep.subr.mxu0 0.0
        %1279 = vmatpush1.msra.mxu0 0.0
        %1280 = vmatprep.subr.mxu0 0.0
        %1281 = vmatpush1.msra.mxu0 0.0
        %1282 = vmatprep.subr.mxu0 0.0
        %1283 = vmatpush1.msra.mxu0 0.0
        %1284 = vmatprep.subr.mxu0 0.0
        %1285 = vmatpush1.msra.mxu0 0.0
        %1286 = vmatprep.subr.mxu0 0.0
        %1287 = vmatpush1.msra.mxu0 0.0
        %1288 = vmatprep.subr.mxu0 0.0
        %1289 = vmatpush1.msra.mxu0 0.0
        %1290 = vmatprep.subr.mxu0 0.0
        %1291 = vmatpush1.msra.mxu0 0.0
        %1292 = vmatprep.subr.mxu0 0.0
        %1293 = vmatpush1.msra.mxu0 0.0
        %1294 = vmatprep.subr.mxu0 0.0
        %1295 = vmatpush1.msra.mxu0 0.0
        %1296 = vmatprep.subr.mxu0 0.0
        %1297 = vmatpush1.msra.mxu0 0.0
        %1298 = vmatprep.subr.mxu0 0.0
        %1299 = vmatpush1.msra.mxu0 0.0
        %1300 = vmatprep.mubr.f32.mxu0 0.0
        %1301 = vmatmul.mubr.f32.gmra.mrb[0].mxu0 %v1234
        %v1302 = vpop.f32.mrb[0].mxu0
        %v1303 = vadd.f32 %v1231, %v1302
        %v1304 = vpop.f32.mrb[0].mxu0
        %1305 = vdwg.mxu0
        %v1306 = vrot.slane %v924, 4
        %v1307 = vsel %vm497, %v1306, 0
        %1309 = vmatprep.subr.mxu0 0.0
        %1310 = vmatpush1.msra.mxu0 %v1157
        %1311 = vmatprep.subr.mxu0 0.0
        %1312 = vmatpush1.msra.mxu0 0.0
        %1313 = vmatprep.subr.mxu0 0.0
        %1314 = vmatpush1.msra.mxu0 0.0
        %1315 = vmatprep.subr.mxu0 0.0
        %1316 = vmatpush1.msra.mxu0 0.0
        %1317 = vmatprep.subr.mxu0 0.0
        %1318 = vmatpush1.msra.mxu0 0.0
        %1319 = vmatprep.subr.mxu0 0.0
        %1320 = vmatpush1.msra.mxu0 0.0
        %1321 = vmatprep.subr.mxu0 0.0
        %1322 = vmatpush1.msra.mxu0 0.0
        %1323 = vmatprep.subr.mxu0 0.0
        %1324 = vmatpush1.msra.mxu0 0.0
        %1325 = vmatprep.subr.mxu0 0.0
        %1326 = vmatpush1.msra.mxu0 0.0
        %1327 = vmatprep.subr.mxu0 0.0
        %1328 = vmatpush1.msra.mxu0 0.0
        %1329 = vmatprep.subr.mxu0 0.0
        %1330 = vmatpush1.msra.mxu0 0.0
        %1331 = vmatprep.subr.mxu0 0.0
        %1332 = vmatpush1.msra.mxu0 0.0
        %1333 = vmatprep.subr.mxu0 0.0
        %1334 = vmatpush1.msra.mxu0 0.0
        %1335 = vmatprep.subr.mxu0 0.0
        %1336 = vmatpush1.msra.mxu0 0.0
        %1337 = vmatprep.subr.mxu0 0.0
        %1338 = vmatpush1.msra.mxu0 0.0
        %1339 = vmatprep.subr.mxu0 0.0
        %1340 = vmatpush1.msra.mxu0 0.0
        %1341 = vmatprep.subr.mxu0 0.0
        %1342 = vmatpush1.msra.mxu0 0.0
        %1343 = vmatprep.subr.mxu0 0.0
        %1344 = vmatpush1.msra.mxu0 0.0
        %1345 = vmatprep.subr.mxu0 0.0
        %1346 = vmatpush1.msra.mxu0 0.0
        %1347 = vmatprep.subr.mxu0 0.0
        %1348 = vmatpush1.msra.mxu0 0.0
        %1349 = vmatprep.subr.mxu0 0.0
        %1350 = vmatpush1.msra.mxu0 0.0
        %1351 = vmatprep.subr.mxu0 0.0
        %1352 = vmatpush1.msra.mxu0 0.0
        %1353 = vmatprep.subr.mxu0 0.0
        %1354 = vmatpush1.msra.mxu0 0.0
        %1355 = vmatprep.subr.mxu0 0.0
        %1356 = vmatpush1.msra.mxu0 0.0
        %1357 = vmatprep.subr.mxu0 0.0
        %1358 = vmatpush1.msra.mxu0 0.0
        %1359 = vmatprep.subr.mxu0 0.0
        %1360 = vmatpush1.msra.mxu0 0.0
        %1361 = vmatprep.subr.mxu0 0.0
        %1362 = vmatpush1.msra.mxu0 0.0
        %1363 = vmatprep.subr.mxu0 0.0
        %1364 = vmatpush1.msra.mxu0 0.0
        %1365 = vmatprep.subr.mxu0 0.0
        %1366 = vmatpush1.msra.mxu0 0.0
        %1367 = vmatprep.subr.mxu0 0.0
        %1368 = vmatpush1.msra.mxu0 0.0
        %1369 = vmatprep.subr.mxu0 0.0
        %1370 = vmatpush1.msra.mxu0 0.0
        %1371 = vmatprep.subr.mxu0 0.0
        %1372 = vmatpush1.msra.mxu0 0.0
        %1373 = vmatprep.mubr.f32.mxu0 0.0
        %1374 = vmatmul.mubr.f32.gmra.mrb[0].mxu0 %v1307
        %v1375 = vpop.f32.mrb[0].mxu0
        %v1376 = vadd.f32 0.0, %v1375
        %v1377 = vpop.f32.mrb[0].mxu0
        %1378 = vdwg.mxu0
        %v1379 = vadd.f32 %v1303, %v1376
        %v1380 = vrot.slane %v924, 6
        %v1381 = vsel %vm497, %v1380, 0
        %1383 = vmatprep.subr.mxu0 0.0
        %1384 = vmatpush1.msra.mxu0 %v1158
        %1385 = vmatprep.subr.mxu0 0.0
        %1386 = vmatpush1.msra.mxu0 0.0
        %1387 = vmatprep.subr.mxu0 0.0
        %1388 = vmatpush1.msra.mxu0 0.0
        %1389 = vmatprep.subr.mxu0 0.0
        %1390 = vmatpush1.msra.mxu0 0.0
        %1391 = vmatprep.subr.mxu0 0.0
        %1392 = vmatpush1.msra.mxu0 0.0
        %1393 = vmatprep.subr.mxu0 0.0
        %1394 = vmatpush1.msra.mxu0 0.0
        %1395 = vmatprep.subr.mxu0 0.0
        %1396 = vmatpush1.msra.mxu0 0.0
        %1397 = vmatprep.subr.mxu0 0.0
        %1398 = vmatpush1.msra.mxu0 0.0
        %1399 = vmatprep.subr.mxu0 0.0
        %1400 = vmatpush1.msra.mxu0 0.0
        %1401 = vmatprep.subr.mxu0 0.0
        %1402 = vmatpush1.msra.mxu0 0.0
        %1403 = vmatprep.subr.mxu0 0.0
        %1404 = vmatpush1.msra.mxu0 0.0
        %1405 = vmatprep.subr.mxu0 0.0
        %1406 = vmatpush1.msra.mxu0 0.0
        %1407 = vmatprep.subr.mxu0 0.0
        %1408 = vmatpush1.msra.mxu0 0.0
        %1409 = vmatprep.subr.mxu0 0.0
        %1410 = vmatpush1.msra.mxu0 0.0
        %1411 = vmatprep.subr.mxu0 0.0
        %1412 = vmatpush1.msra.mxu0 0.0
        %1413 = vmatprep.subr.mxu0 0.0
        %1414 = vmatpush1.msra.mxu0 0.0
        %1415 = vmatprep.subr.mxu0 0.0
        %1416 = vmatpush1.msra.mxu0 0.0
        %1417 = vmatprep.subr.mxu0 0.0
        %1418 = vmatpush1.msra.mxu0 0.0
        %1419 = vmatprep.subr.mxu0 0.0
        %1420 = vmatpush1.msra.mxu0 0.0
        %1421 = vmatprep.subr.mxu0 0.0
        %1422 = vmatpush1.msra.mxu0 0.0
        %1423 = vmatprep.subr.mxu0 0.0
        %1424 = vmatpush1.msra.mxu0 0.0
        %1425 = vmatprep.subr.mxu0 0.0
        %1426 = vmatpush1.msra.mxu0 0.0
        %1427 = vmatprep.subr.mxu0 0.0
        %1428 = vmatpush1.msra.mxu0 0.0
        %1429 = vmatprep.subr.mxu0 0.0
        %1430 = vmatpush1.msra.mxu0 0.0
        %1431 = vmatprep.subr.mxu0 0.0
        %1432 = vmatpush1.msra.mxu0 0.0
        %1433 = vmatprep.subr.mxu0 0.0
        %1434 = vmatpush1.msra.mxu0 0.0
        %1435 = vmatprep.subr.mxu0 0.0
        %1436 = vmatpush1.msra.mxu0 0.0
        %1437 = vmatprep.subr.mxu0 0.0
        %1438 = vmatpush1.msra.mxu0 0.0
        %1439 = vmatprep.subr.mxu0 0.0
        %1440 = vmatpush1.msra.mxu0 0.0
        %1441 = vmatprep.subr.mxu0 0.0
        %1442 = vmatpush1.msra.mxu0 0.0
        %1443 = vmatprep.subr.mxu0 0.0
        %1444 = vmatpush1.msra.mxu0 0.0
        %1445 = vmatprep.subr.mxu0 0.0
        %1446 = vmatpush1.msra.mxu0 0.0
        %1447 = vmatprep.mubr.f32.mxu0 0.0
        %1448 = vmatmul.mubr.f32.gmra.mrb[0].mxu0 %v1381
        %v1449 = vpop.f32.mrb[0].mxu0
        %v1450 = vadd.f32 0.0, %v1449
        %v1451 = vpop.f32.mrb[0].mxu0
        %1452 = vdwg.mxu0
        %v1453 = vadd.f32 %v1379, %v1450
        %v1455 = vlaneseq
        %v1456 = vshrl.u32 %v1455, 7
        %v1457 = vsub.s32 0, %v1456
        %v1458 = vrot.slane %v1159, %v1457
        %v1460 = vadd.f32 %v1453, %v1458
        %vm1461 = vcmask 254976
        %1462 = vst.msk [vmem:[%s188] sm:$0x3] %vm1461, %v1460
        %v1464 = vrot.slane %v1000, 2
        %v1465 = vsel %vm497, %v1464, 0
        %1467 = vmatprep.subr.mxu0 0.0
        %1468 = vmatpush1.msra.mxu0 %v1156
        %1469 = vmatprep.subr.mxu0 0.0
        %1470 = vmatpush1.msra.mxu0 0.0
        %1471 = vmatprep.subr.mxu0 0.0
        %1472 = vmatpush1.msra.mxu0 0.0
        %1473 = vmatprep.subr.mxu0 0.0
        %1474 = vmatpush1.msra.mxu0 0.0
        %1475 = vmatprep.subr.mxu0 0.0
        %1476 = vmatpush1.msra.mxu0 0.0
        %1477 = vmatprep.subr.mxu0 0.0
        %1478 = vmatpush1.msra.mxu0 0.0
        %1479 = vmatprep.subr.mxu0 0.0
        %1480 = vmatpush1.msra.mxu0 0.0
        %1481 = vmatprep.subr.mxu0 0.0
        %1482 = vmatpush1.msra.mxu0 0.0
        %1483 = vmatprep.subr.mxu0 0.0
        %1484 = vmatpush1.msra.mxu0 0.0
        %1485 = vmatprep.subr.mxu0 0.0
        %1486 = vmatpush1.msra.mxu0 0.0
        %1487 = vmatprep.subr.mxu0 0.0
        %1488 = vmatpush1.msra.mxu0 0.0
        %1489 = vmatprep.subr.mxu0 0.0
        %1490 = vmatpush1.msra.mxu0 0.0
        %1491 = vmatprep.subr.mxu0 0.0
        %1492 = vmatpush1.msra.mxu0 0.0
        %1493 = vmatprep.subr.mxu0 0.0
        %1494 = vmatpush1.msra.mxu0 0.0
        %1495 = vmatprep.subr.mxu0 0.0
        %1496 = vmatpush1.msra.mxu0 0.0
        %1497 = vmatprep.subr.mxu0 0.0
        %1498 = vmatpush1.msra.mxu0 0.0
        %1499 = vmatprep.subr.mxu0 0.0
        %1500 = vmatpush1.msra.mxu0 0.0
        %1501 = vmatprep.subr.mxu0 0.0
        %1502 = vmatpush1.msra.mxu0 0.0
        %1503 = vmatprep.subr.mxu0 0.0
        %1504 = vmatpush1.msra.mxu0 0.0
        %1505 = vmatprep.subr.mxu0 0.0
        %1506 = vmatpush1.msra.mxu0 0.0
        %1507 = vmatprep.subr.mxu0 0.0
        %1508 = vmatpush1.msra.mxu0 0.0
        %1509 = vmatprep.subr.mxu0 0.0
        %1510 = vmatpush1.msra.mxu0 0.0
        %1511 = vmatprep.subr.mxu0 0.0
        %1512 = vmatpush1.msra.mxu0 0.0
        %1513 = vmatprep.subr.mxu0 0.0
        %1514 = vmatpush1.msra.mxu0 0.0
        %1515 = vmatprep.subr.mxu0 0.0
        %1516 = vmatpush1.msra.mxu0 0.0
        %1517 = vmatprep.subr.mxu0 0.0
        %1518 = vmatpush1.msra.mxu0 0.0
        %1519 = vmatprep.subr.mxu0 0.0
        %1520 = vmatpush1.msra.mxu0 0.0
        %1521 = vmatprep.subr.mxu0 0.0
        %1522 = vmatpush1.msra.mxu0 0.0
        %1523 = vmatprep.subr.mxu0 0.0
        %1524 = vmatpush1.msra.mxu0 0.0
        %1525 = vmatprep.subr.mxu0 0.0
        %1526 = vmatpush1.msra.mxu0 0.0
        %1527 = vmatprep.subr.mxu0 0.0
        %1528 = vmatpush1.msra.mxu0 0.0
        %1529 = vmatprep.subr.mxu0 0.0
        %1530 = vmatpush1.msra.mxu0 0.0
        %1531 = vmatprep.mubr.f32.mxu0 0.0
        %1532 = vmatmul.mubr.f32.gmra.mrb[0].mxu0 %v1465
        %v1533 = vpop.f32.mrb[0].mxu0
        %v1534 = vadd.f32 0.0, %v1533
        %v1535 = vpop.f32.mrb[0].mxu0
        %1536 = vdwg.mxu0
        %v1537 = vsel %vm497, %v1000, 0
        %1539 = vmatprep.subr.mxu0 0.0
        %1540 = vmatpush1.msra.mxu0 %v1155
        %1541 = vmatprep.subr.mxu0 0.0
        %1542 = vmatpush1.msra.mxu0 0.0
        %1543 = vmatprep.subr.mxu0 0.0
        %1544 = vmatpush1.msra.mxu0 0.0
        %1545 = vmatprep.subr.mxu0 0.0
        %1546 = vmatpush1.msra.mxu0 0.0
        %1547 = vmatprep.subr.mxu0 0.0
        %1548 = vmatpush1.msra.mxu0 0.0
        %1549 = vmatprep.subr.mxu0 0.0
        %1550 = vmatpush1.msra.mxu0 0.0
        %1551 = vmatprep.subr.mxu0 0.0
        %1552 = vmatpush1.msra.mxu0 0.0
        %1553 = vmatprep.subr.mxu0 0.0
        %1554 = vmatpush1.msra.mxu0 0.0
        %1555 = vmatprep.subr.mxu0 0.0
        %1556 = vmatpush1.msra.mxu0 0.0
        %1557 = vmatprep.subr.mxu0 0.0
        %1558 = vmatpush1.msra.mxu0 0.0
        %1559 = vmatprep.subr.mxu0 0.0
        %1560 = vmatpush1.msra.mxu0 0.0
        %1561 = vmatprep.subr.mxu0 0.0
        %1562 = vmatpush1.msra.mxu0 0.0
        %1563 = vmatprep.subr.mxu0 0.0
        %1564 = vmatpush1.msra.mxu0 0.0
        %1565 = vmatprep.subr.mxu0 0.0
        %1566 = vmatpush1.msra.mxu0 0.0
        %1567 = vmatprep.subr.mxu0 0.0
        %1568 = vmatpush1.msra.mxu0 0.0
        %1569 = vmatprep.subr.mxu0 0.0
        %1570 = vmatpush1.msra.mxu0 0.0
        %1571 = vmatprep.subr.mxu0 0.0
        %1572 = vmatpush1.msra.mxu0 0.0
        %1573 = vmatprep.subr.mxu0 0.0
        %1574 = vmatpush1.msra.mxu0 0.0
        %1575 = vmatprep.subr.mxu0 0.0
        %1576 = vmatpush1.msra.mxu0 0.0
        %1577 = vmatprep.subr.mxu0 0.0
        %1578 = vmatpush1.msra.mxu0 0.0
        %1579 = vmatprep.subr.mxu0 0.0
        %1580 = vmatpush1.msra.mxu0 0.0
        %1581 = vmatprep.subr.mxu0 0.0
        %1582 = vmatpush1.msra.mxu0 0.0
        %1583 = vmatprep.subr.mxu0 0.0
        %1584 = vmatpush1.msra.mxu0 0.0
        %1585 = vmatprep.subr.mxu0 0.0
        %1586 = vmatpush1.msra.mxu0 0.0
        %1587 = vmatprep.subr.mxu0 0.0
        %1588 = vmatpush1.msra.mxu0 0.0
        %1589 = vmatprep.subr.mxu0 0.0
        %1590 = vmatpush1.msra.mxu0 0.0
        %1591 = vmatprep.subr.mxu0 0.0
        %1592 = vmatpush1.msra.mxu0 0.0
        %1593 = vmatprep.subr.mxu0 0.0
        %1594 = vmatpush1.msra.mxu0 0.0
        %1595 = vmatprep.subr.mxu0 0.0
        %1596 = vmatpush1.msra.mxu0 0.0
        %1597 = vmatprep.subr.mxu0 0.0
        %1598 = vmatpush1.msra.mxu0 0.0
        %1599 = vmatprep.subr.mxu0 0.0
        %1600 = vmatpush1.msra.mxu0 0.0
        %1601 = vmatprep.subr.mxu0 0.0
        %1602 = vmatpush1.msra.mxu0 0.0
        %1603 = vmatprep.mubr.f32.mxu0 0.0
        %1604 = vmatmul.mubr.f32.gmra.mrb[0].mxu0 %v1537
        %v1605 = vpop.f32.mrb[0].mxu0
        %v1606 = vadd.f32 %v1534, %v1605
        %v1607 = vpop.f32.mrb[0].mxu0
        %1608 = vdwg.mxu0
        %v1609 = vrot.slane %v1000, 4
        %v1610 = vsel %vm497, %v1609, 0
        %1612 = vmatprep.subr.mxu0 0.0
        %1613 = vmatpush1.msra.mxu0 %v1157
        %1614 = vmatprep.subr.mxu0 0.0
        %1615 = vmatpush1.msra.mxu0 0.0
        %1616 = vmatprep.subr.mxu0 0.0
        %1617 = vmatpush1.msra.mxu0 0.0
        %1618 = vmatprep.subr.mxu0 0.0
        %1619 = vmatpush1.msra.mxu0 0.0
        %1620 = vmatprep.subr.mxu0 0.0
        %1621 = vmatpush1.msra.mxu0 0.0
        %1622 = vmatprep.subr.mxu0 0.0
        %1623 = vmatpush1.msra.mxu0 0.0
        %1624 = vmatprep.subr.mxu0 0.0
        %1625 = vmatpush1.msra.mxu0 0.0
        %1626 = vmatprep.subr.mxu0 0.0
        %1627 = vmatpush1.msra.mxu0 0.0
        %1628 = vmatprep.subr.mxu0 0.0
        %1629 = vmatpush1.msra.mxu0 0.0
        %1630 = vmatprep.subr.mxu0 0.0
        %1631 = vmatpush1.msra.mxu0 0.0
        %1632 = vmatprep.subr.mxu0 0.0
        %1633 = vmatpush1.msra.mxu0 0.0
        %1634 = vmatprep.subr.mxu0 0.0
        %1635 = vmatpush1.msra.mxu0 0.0
        %1636 = vmatprep.subr.mxu0 0.0
        %1637 = vmatpush1.msra.mxu0 0.0
        %1638 = vmatprep.subr.mxu0 0.0
        %1639 = vmatpush1.msra.mxu0 0.0
        %1640 = vmatprep.subr.mxu0 0.0
        %1641 = vmatpush1.msra.mxu0 0.0
        %1642 = vmatprep.subr.mxu0 0.0
        %1643 = vmatpush1.msra.mxu0 0.0
        %1644 = vmatprep.subr.mxu0 0.0
        %1645 = vmatpush1.msra.mxu0 0.0
        %1646 = vmatprep.subr.mxu0 0.0
        %1647 = vmatpush1.msra.mxu0 0.0
        %1648 = vmatprep.subr.mxu0 0.0
        %1649 = vmatpush1.msra.mxu0 0.0
        %1650 = vmatprep.subr.mxu0 0.0
        %1651 = vmatpush1.msra.mxu0 0.0
        %1652 = vmatprep.subr.mxu0 0.0
        %1653 = vmatpush1.msra.mxu0 0.0
        %1654 = vmatprep.subr.mxu0 0.0
        %1655 = vmatpush1.msra.mxu0 0.0
        %1656 = vmatprep.subr.mxu0 0.0
        %1657 = vmatpush1.msra.mxu0 0.0
        %1658 = vmatprep.subr.mxu0 0.0
        %1659 = vmatpush1.msra.mxu0 0.0
        %1660 = vmatprep.subr.mxu0 0.0
        %1661 = vmatpush1.msra.mxu0 0.0
        %1662 = vmatprep.subr.mxu0 0.0
        %1663 = vmatpush1.msra.mxu0 0.0
        %1664 = vmatprep.subr.mxu0 0.0
        %1665 = vmatpush1.msra.mxu0 0.0
        %1666 = vmatprep.subr.mxu0 0.0
        %1667 = vmatpush1.msra.mxu0 0.0
        %1668 = vmatprep.subr.mxu0 0.0
        %1669 = vmatpush1.msra.mxu0 0.0
        %1670 = vmatprep.subr.mxu0 0.0
        %1671 = vmatpush1.msra.mxu0 0.0
        %1672 = vmatprep.subr.mxu0 0.0
        %1673 = vmatpush1.msra.mxu0 0.0
        %1674 = vmatprep.subr.mxu0 0.0
        %1675 = vmatpush1.msra.mxu0 0.0
        %1676 = vmatprep.mubr.f32.mxu0 0.0
        %1677 = vmatmul.mubr.f32.gmra.mrb[0].mxu0 %v1610
        %v1678 = vpop.f32.mrb[0].mxu0
        %v1679 = vadd.f32 0.0, %v1678
        %v1680 = vpop.f32.mrb[0].mxu0
        %1681 = vdwg.mxu0
        %v1682 = vadd.f32 %v1606, %v1679
        %v1683 = vrot.slane %v1000, 6
        %v1684 = vsel %vm497, %v1683, 0
        %1686 = vmatprep.subr.mxu0 0.0
        %1687 = vmatpush1.msra.mxu0 %v1158
        %1688 = vmatprep.subr.mxu0 0.0
        %1689 = vmatpush1.msra.mxu0 0.0
        %1690 = vmatprep.subr.mxu0 0.0
        %1691 = vmatpush1.msra.mxu0 0.0
        %1692 = vmatprep.subr.mxu0 0.0
        %1693 = vmatpush1.msra.mxu0 0.0
        %1694 = vmatprep.subr.mxu0 0.0
        %1695 = vmatpush1.msra.mxu0 0.0
        %1696 = vmatprep.subr.mxu0 0.0
        %1697 = vmatpush1.msra.mxu0 0.0
        %1698 = vmatprep.subr.mxu0 0.0
        %1699 = vmatpush1.msra.mxu0 0.0
        %1700 = vmatprep.subr.mxu0 0.0
        %1701 = vmatpush1.msra.mxu0 0.0
        %1702 = vmatprep.subr.mxu0 0.0
        %1703 = vmatpush1.msra.mxu0 0.0
        %1704 = vmatprep.subr.mxu0 0.0
        %1705 = vmatpush1.msra.mxu0 0.0
        %1706 = vmatprep.subr.mxu0 0.0
        %1707 = vmatpush1.msra.mxu0 0.0
        %1708 = vmatprep.subr.mxu0 0.0
        %1709 = vmatpush1.msra.mxu0 0.0
        %1710 = vmatprep.subr.mxu0 0.0
        %1711 = vmatpush1.msra.mxu0 0.0
        %1712 = vmatprep.subr.mxu0 0.0
        %1713 = vmatpush1.msra.mxu0 0.0
        %1714 = vmatprep.subr.mxu0 0.0
        %1715 = vmatpush1.msra.mxu0 0.0
        %1716 = vmatprep.subr.mxu0 0.0
        %1717 = vmatpush1.msra.mxu0 0.0
        %1718 = vmatprep.subr.mxu0 0.0
        %1719 = vmatpush1.msra.mxu0 0.0
        %1720 = vmatprep.subr.mxu0 0.0
        %1721 = vmatpush1.msra.mxu0 0.0
        %1722 = vmatprep.subr.mxu0 0.0
        %1723 = vmatpush1.msra.mxu0 0.0
        %1724 = vmatprep.subr.mxu0 0.0
        %1725 = vmatpush1.msra.mxu0 0.0
        %1726 = vmatprep.subr.mxu0 0.0
        %1727 = vmatpush1.msra.mxu0 0.0
        %1728 = vmatprep.subr.mxu0 0.0
        %1729 = vmatpush1.msra.mxu0 0.0
        %1730 = vmatprep.subr.mxu0 0.0
        %1731 = vmatpush1.msra.mxu0 0.0
        %1732 = vmatprep.subr.mxu0 0.0
        %1733 = vmatpush1.msra.mxu0 0.0
        %1734 = vmatprep.subr.mxu0 0.0
        %1735 = vmatpush1.msra.mxu0 0.0
        %1736 = vmatprep.subr.mxu0 0.0
        %1737 = vmatpush1.msra.mxu0 0.0
        %1738 = vmatprep.subr.mxu0 0.0
        %1739 = vmatpush1.msra.mxu0 0.0
        %1740 = vmatprep.subr.mxu0 0.0
        %1741 = vmatpush1.msra.mxu0 0.0
        %1742 = vmatprep.subr.mxu0 0.0
        %1743 = vmatpush1.msra.mxu0 0.0
        %1744 = vmatprep.subr.mxu0 0.0
        %1745 = vmatpush1.msra.mxu0 0.0
        %1746 = vmatprep.subr.mxu0 0.0
        %1747 = vmatpush1.msra.mxu0 0.0
        %1748 = vmatprep.subr.mxu0 0.0
        %1749 = vmatpush1.msra.mxu0 0.0
        %1750 = vmatprep.mubr.f32.mxu0 0.0
        %1751 = vmatmul.mubr.f32.gmra.mrb[0].mxu0 %v1684
        %v1752 = vpop.f32.mrb[0].mxu0
        %v1753 = vadd.f32 0.0, %v1752
        %v1754 = vpop.f32.mrb[0].mxu0
        %1755 = vdwg.mxu0
        %v1756 = vadd.f32 %v1682, %v1753
        %v1757 = vadd.f32 %v1756, %v1458
        %1758 = vst.msk [vmem:[%s188 + $0x2] sm:$0x3] %vm1461, %v1757
        %v1760 = vrot.slane %v1076, 2
        %v1761 = vsel %vm497, %v1760, 0
        %1763 = vmatprep.subr.mxu0 0.0
        %1764 = vmatpush1.msra.mxu0 %v1156
        %1765 = vmatprep.subr.mxu0 0.0
        %1766 = vmatpush1.msra.mxu0 0.0
        %1767 = vmatprep.subr.mxu0 0.0
        %1768 = vmatpush1.msra.mxu0 0.0
        %1769 = vmatprep.subr.mxu0 0.0
        %1770 = vmatpush1.msra.mxu0 0.0
        %1771 = vmatprep.subr.mxu0 0.0
        %1772 = vmatpush1.msra.mxu0 0.0
        %1773 = vmatprep.subr.mxu0 0.0
        %1774 = vmatpush1.msra.mxu0 0.0
        %1775 = vmatprep.subr.mxu0 0.0
        %1776 = vmatpush1.msra.mxu0 0.0
        %1777 = vmatprep.subr.mxu0 0.0
        %1778 = vmatpush1.msra.mxu0 0.0
        %1779 = vmatprep.subr.mxu0 0.0
        %1780 = vmatpush1.msra.mxu0 0.0
        %1781 = vmatprep.subr.mxu0 0.0
        %1782 = vmatpush1.msra.mxu0 0.0
        %1783 = vmatprep.subr.mxu0 0.0
        %1784 = vmatpush1.msra.mxu0 0.0
        %1785 = vmatprep.subr.mxu0 0.0
        %1786 = vmatpush1.msra.mxu0 0.0
        %1787 = vmatprep.subr.mxu0 0.0
        %1788 = vmatpush1.msra.mxu0 0.0
        %1789 = vmatprep.subr.mxu0 0.0
        %1790 = vmatpush1.msra.mxu0 0.0
        %1791 = vmatprep.subr.mxu0 0.0
        %1792 = vmatpush1.msra.mxu0 0.0
        %1793 = vmatprep.subr.mxu0 0.0
        %1794 = vmatpush1.msra.mxu0 0.0
        %1795 = vmatprep.subr.mxu0 0.0
        %1796 = vmatpush1.msra.mxu0 0.0
        %1797 = vmatprep.subr.mxu0 0.0
        %1798 = vmatpush1.msra.mxu0 0.0
        %1799 = vmatprep.subr.mxu0 0.0
        %1800 = vmatpush1.msra.mxu0 0.0
        %1801 = vmatprep.subr.mxu0 0.0
        %1802 = vmatpush1.msra.mxu0 0.0
        %1803 = vmatprep.subr.mxu0 0.0
        %1804 = vmatpush1.msra.mxu0 0.0
        %1805 = vmatprep.subr.mxu0 0.0
        %1806 = vmatpush1.msra.mxu0 0.0
        %1807 = vmatprep.subr.mxu0 0.0
        %1808 = vmatpush1.msra.mxu0 0.0
        %1809 = vmatprep.subr.mxu0 0.0
        %1810 = vmatpush1.msra.mxu0 0.0
        %1811 = vmatprep.subr.mxu0 0.0
        %1812 = vmatpush1.msra.mxu0 0.0
        %1813 = vmatprep.subr.mxu0 0.0
        %1814 = vmatpush1.msra.mxu0 0.0
        %1815 = vmatprep.subr.mxu0 0.0
        %1816 = vmatpush1.msra.mxu0 0.0
        %1817 = vmatprep.subr.mxu0 0.0
        %1818 = vmatpush1.msra.mxu0 0.0
        %1819 = vmatprep.subr.mxu0 0.0
        %1820 = vmatpush1.msra.mxu0 0.0
        %1821 = vmatprep.subr.mxu0 0.0
        %1822 = vmatpush1.msra.mxu0 0.0
        %1823 = vmatprep.subr.mxu0 0.0
        %1824 = vmatpush1.msra.mxu0 0.0
        %1825 = vmatprep.subr.mxu0 0.0
        %1826 = vmatpush1.msra.mxu0 0.0
        %1827 = vmatprep.mubr.f32.mxu0 0.0
        %1828 = vmatmul.mubr.f32.gmra.mrb[0].mxu0 %v1761
        %v1829 = vpop.f32.mrb[0].mxu0
        %v1830 = vadd.f32 0.0, %v1829
        %v1831 = vpop.f32.mrb[0].mxu0
        %1832 = vdwg.mxu0
        %v1833 = vsel %vm497, %v1076, 0
        %1835 = vmatprep.subr.mxu0 0.0
        %1836 = vmatpush1.msra.mxu0 %v1155
        %1837 = vmatprep.subr.mxu0 0.0
        %1838 = vmatpush1.msra.mxu0 0.0
        %1839 = vmatprep.subr.mxu0 0.0
        %1840 = vmatpush1.msra.mxu0 0.0
        %1841 = vmatprep.subr.mxu0 0.0
        %1842 = vmatpush1.msra.mxu0 0.0
        %1843 = vmatprep.subr.mxu0 0.0
        %1844 = vmatpush1.msra.mxu0 0.0
        %1845 = vmatprep.subr.mxu0 0.0
        %1846 = vmatpush1.msra.mxu0 0.0
        %1847 = vmatprep.subr.mxu0 0.0
        %1848 = vmatpush1.msra.mxu0 0.0
        %1849 = vmatprep.subr.mxu0 0.0
        %1850 = vmatpush1.msra.mxu0 0.0
        %1851 = vmatprep.subr.mxu0 0.0
        %1852 = vmatpush1.msra.mxu0 0.0
        %1853 = vmatprep.subr.mxu0 0.0
        %1854 = vmatpush1.msra.mxu0 0.0
        %1855 = vmatprep.subr.mxu0 0.0
        %1856 = vmatpush1.msra.mxu0 0.0
        %1857 = vmatprep.subr.mxu0 0.0
        %1858 = vmatpush1.msra.mxu0 0.0
        %1859 = vmatprep.subr.mxu0 0.0
        %1860 = vmatpush1.msra.mxu0 0.0
        %1861 = vmatprep.subr.mxu0 0.0
        %1862 = vmatpush1.msra.mxu0 0.0
        %1863 = vmatprep.subr.mxu0 0.0
        %1864 = vmatpush1.msra.mxu0 0.0
        %1865 = vmatprep.subr.mxu0 0.0
        %1866 = vmatpush1.msra.mxu0 0.0
        %1867 = vmatprep.subr.mxu0 0.0
        %1868 = vmatpush1.msra.mxu0 0.0
        %1869 = vmatprep.subr.mxu0 0.0
        %1870 = vmatpush1.msra.mxu0 0.0
        %1871 = vmatprep.subr.mxu0 0.0
        %1872 = vmatpush1.msra.mxu0 0.0
        %1873 = vmatprep.subr.mxu0 0.0
        %1874 = vmatpush1.msra.mxu0 0.0
        %1875 = vmatprep.subr.mxu0 0.0
        %1876 = vmatpush1.msra.mxu0 0.0
        %1877 = vmatprep.subr.mxu0 0.0
        %1878 = vmatpush1.msra.mxu0 0.0
        %1879 = vmatprep.subr.mxu0 0.0
        %1880 = vmatpush1.msra.mxu0 0.0
        %1881 = vmatprep.subr.mxu0 0.0
        %1882 = vmatpush1.msra.mxu0 0.0
        %1883 = vmatprep.subr.mxu0 0.0
        %1884 = vmatpush1.msra.mxu0 0.0
        %1885 = vmatprep.subr.mxu0 0.0
        %1886 = vmatpush1.msra.mxu0 0.0
        %1887 = vmatprep.subr.mxu0 0.0
        %1888 = vmatpush1.msra.mxu0 0.0
        %1889 = vmatprep.subr.mxu0 0.0
        %1890 = vmatpush1.msra.mxu0 0.0
        %1891 = vmatprep.subr.mxu0 0.0
        %1892 = vmatpush1.msra.mxu0 0.0
        %1893 = vmatprep.subr.mxu0 0.0
        %1894 = vmatpush1.msra.mxu0 0.0
        %1895 = vmatprep.subr.mxu0 0.0
        %1896 = vmatpush1.msra.mxu0 0.0
        %1897 = vmatprep.subr.mxu0 0.0
        %1898 = vmatpush1.msra.mxu0 0.0
        %1899 = vmatprep.mubr.f32.mxu0 0.0
        %1900 = vmatmul.mubr.f32.gmra.mrb[0].mxu0 %v1833
        %v1901 = vpop.f32.mrb[0].mxu0
        %v1902 = vadd.f32 %v1830, %v1901
        %v1903 = vpop.f32.mrb[0].mxu0
        %1904 = vdwg.mxu0
        %v1905 = vrot.slane %v1076, 4
        %v1906 = vsel %vm497, %v1905, 0
        %1908 = vmatprep.subr.mxu0 0.0
        %1909 = vmatpush1.msra.mxu0 %v1157
        %1910 = vmatprep.subr.mxu0 0.0
        %1911 = vmatpush1.msra.mxu0 0.0
        %1912 = vmatprep.subr.mxu0 0.0
        %1913 = vmatpush1.msra.mxu0 0.0
        %1914 = vmatprep.subr.mxu0 0.0
        %1915 = vmatpush1.msra.mxu0 0.0
        %1916 = vmatprep.subr.mxu0 0.0
        %1917 = vmatpush1.msra.mxu0 0.0
        %1918 = vmatprep.subr.mxu0 0.0
        %1919 = vmatpush1.msra.mxu0 0.0
        %1920 = vmatprep.subr.mxu0 0.0
        %1921 = vmatpush1.msra.mxu0 0.0
        %1922 = vmatprep.subr.mxu0 0.0
        %1923 = vmatpush1.msra.mxu0 0.0
        %1924 = vmatprep.subr.mxu0 0.0
        %1925 = vmatpush1.msra.mxu0 0.0
        %1926 = vmatprep.subr.mxu0 0.0
        %1927 = vmatpush1.msra.mxu0 0.0
        %1928 = vmatprep.subr.mxu0 0.0
        %1929 = vmatpush1.msra.mxu0 0.0
        %1930 = vmatprep.subr.mxu0 0.0
        %1931 = vmatpush1.msra.mxu0 0.0
        %1932 = vmatprep.subr.mxu0 0.0
        %1933 = vmatpush1.msra.mxu0 0.0
        %1934 = vmatprep.subr.mxu0 0.0
        %1935 = vmatpush1.msra.mxu0 0.0
        %1936 = vmatprep.subr.mxu0 0.0
        %1937 = vmatpush1.msra.mxu0 0.0
        %1938 = vmatprep.subr.mxu0 0.0
        %1939 = vmatpush1.msra.mxu0 0.0
        %1940 = vmatprep.subr.mxu0 0.0
        %1941 = vmatpush1.msra.mxu0 0.0
        %1942 = vmatprep.subr.mxu0 0.0
        %1943 = vmatpush1.msra.mxu0 0.0
        %1944 = vmatprep.subr.mxu0 0.0
        %1945 = vmatpush1.msra.mxu0 0.0
        %1946 = vmatprep.subr.mxu0 0.0
        %1947 = vmatpush1.msra.mxu0 0.0
        %1948 = vmatprep.subr.mxu0 0.0
        %1949 = vmatpush1.msra.mxu0 0.0
        %1950 = vmatprep.subr.mxu0 0.0
        %1951 = vmatpush1.msra.mxu0 0.0
        %1952 = vmatprep.subr.mxu0 0.0
        %1953 = vmatpush1.msra.mxu0 0.0
        %1954 = vmatprep.subr.mxu0 0.0
        %1955 = vmatpush1.msra.mxu0 0.0
        %1956 = vmatprep.subr.mxu0 0.0
        %1957 = vmatpush1.msra.mxu0 0.0
        %1958 = vmatprep.subr.mxu0 0.0
        %1959 = vmatpush1.msra.mxu0 0.0
        %1960 = vmatprep.subr.mxu0 0.0
        %1961 = vmatpush1.msra.mxu0 0.0
        %1962 = vmatprep.subr.mxu0 0.0
        %1963 = vmatpush1.msra.mxu0 0.0
        %1964 = vmatprep.subr.mxu0 0.0
        %1965 = vmatpush1.msra.mxu0 0.0
        %1966 = vmatprep.subr.mxu0 0.0
        %1967 = vmatpush1.msra.mxu0 0.0
        %1968 = vmatprep.subr.mxu0 0.0
        %1969 = vmatpush1.msra.mxu0 0.0
        %1970 = vmatprep.subr.mxu0 0.0
        %1971 = vmatpush1.msra.mxu0 0.0
        %1972 = vmatprep.mubr.f32.mxu0 0.0
        %1973 = vmatmul.mubr.f32.gmra.mrb[0].mxu0 %v1906
        %v1974 = vpop.f32.mrb[0].mxu0
        %v1975 = vadd.f32 0.0, %v1974
        %v1976 = vpop.f32.mrb[0].mxu0
        %1977 = vdwg.mxu0
        %v1978 = vadd.f32 %v1902, %v1975
        %v1979 = vrot.slane %v1076, 6
        %v1980 = vsel %vm497, %v1979, 0
        %1982 = vmatprep.subr.mxu0 0.0
        %1983 = vmatpush1.msra.mxu0 %v1158
        %1984 = vmatprep.subr.mxu0 0.0
        %1985 = vmatpush1.msra.mxu0 0.0
        %1986 = vmatprep.subr.mxu0 0.0
        %1987 = vmatpush1.msra.mxu0 0.0
        %1988 = vmatprep.subr.mxu0 0.0
        %1989 = vmatpush1.msra.mxu0 0.0
        %1990 = vmatprep.subr.mxu0 0.0
        %1991 = vmatpush1.msra.mxu0 0.0
        %1992 = vmatprep.subr.mxu0 0.0
        %1993 = vmatpush1.msra.mxu0 0.0
        %1994 = vmatprep.subr.mxu0 0.0
        %1995 = vmatpush1.msra.mxu0 0.0
        %1996 = vmatprep.subr.mxu0 0.0
        %1997 = vmatpush1.msra.mxu0 0.0
        %1998 = vmatprep.subr.mxu0 0.0
        %1999 = vmatpush1.msra.mxu0 0.0
        %2000 = vmatprep.subr.mxu0 0.0
        %2001 = vmatpush1.msra.mxu0 0.0
        %2002 = vmatprep.subr.mxu0 0.0
        %2003 = vmatpush1.msra.mxu0 0.0
        %2004 = vmatprep.subr.mxu0 0.0
        %2005 = vmatpush1.msra.mxu0 0.0
        %2006 = vmatprep.subr.mxu0 0.0
        %2007 = vmatpush1.msra.mxu0 0.0
        %2008 = vmatprep.subr.mxu0 0.0
        %2009 = vmatpush1.msra.mxu0 0.0
        %2010 = vmatprep.subr.mxu0 0.0
        %2011 = vmatpush1.msra.mxu0 0.0
        %2012 = vmatprep.subr.mxu0 0.0
        %2013 = vmatpush1.msra.mxu0 0.0
        %2014 = vmatprep.subr.mxu0 0.0
        %2015 = vmatpush1.msra.mxu0 0.0
        %2016 = vmatprep.subr.mxu0 0.0
        %2017 = vmatpush1.msra.mxu0 0.0
        %2018 = vmatprep.subr.mxu0 0.0
        %2019 = vmatpush1.msra.mxu0 0.0
        %2020 = vmatprep.subr.mxu0 0.0
        %2021 = vmatpush1.msra.mxu0 0.0
        %2022 = vmatprep.subr.mxu0 0.0
        %2023 = vmatpush1.msra.mxu0 0.0
        %2024 = vmatprep.subr.mxu0 0.0
        %2025 = vmatpush1.msra.mxu0 0.0
        %2026 = vmatprep.subr.mxu0 0.0
        %2027 = vmatpush1.msra.mxu0 0.0
        %2028 = vmatprep.subr.mxu0 0.0
        %2029 = vmatpush1.msra.mxu0 0.0
        %2030 = vmatprep.subr.mxu0 0.0
        %2031 = vmatpush1.msra.mxu0 0.0
        %2032 = vmatprep.subr.mxu0 0.0
        %2033 = vmatpush1.msra.mxu0 0.0
        %2034 = vmatprep.subr.mxu0 0.0
        %2035 = vmatpush1.msra.mxu0 0.0
        %2036 = vmatprep.subr.mxu0 0.0
        %2037 = vmatpush1.msra.mxu0 0.0
        %2038 = vmatprep.subr.mxu0 0.0
        %2039 = vmatpush1.msra.mxu0 0.0
        %2040 = vmatprep.subr.mxu0 0.0
        %2041 = vmatpush1.msra.mxu0 0.0
        %2042 = vmatprep.subr.mxu0 0.0
        %2043 = vmatpush1.msra.mxu0 0.0
        %2044 = vmatprep.subr.mxu0 0.0
        %2045 = vmatpush1.msra.mxu0 0.0
        %2046 = vmatprep.mubr.f32.mxu0 0.0
        %2047 = vmatmul.mubr.f32.gmra.mrb[0].mxu0 %v1980
        %v2048 = vpop.f32.mrb[0].mxu0
        %v2049 = vadd.f32 0.0, %v2048
        %v2050 = vpop.f32.mrb[0].mxu0
        %2051 = vdwg.mxu0
        %v2052 = vadd.f32 %v1978, %v2049
        %v2053 = vadd.f32 %v2052, %v1458
        %2054 = vst.msk [vmem:[%s188 + $0x4] sm:$0x3] %vm1461, %v2053
        %v2056 = vrot.slane %v1152, 2
        %v2057 = vsel %vm497, %v2056, 0
        %2059 = vmatprep.subr.mxu0 0.0
        %2060 = vmatpush1.msra.mxu0 %v1156
        %2061 = vmatprep.subr.mxu0 0.0
        %2062 = vmatpush1.msra.mxu0 0.0
        %2063 = vmatprep.subr.mxu0 0.0
        %2064 = vmatpush1.msra.mxu0 0.0
        %2065 = vmatprep.subr.mxu0 0.0
        %2066 = vmatpush1.msra.mxu0 0.0
        %2067 = vmatprep.subr.mxu0 0.0
        %2068 = vmatpush1.msra.mxu0 0.0
        %2069 = vmatprep.subr.mxu0 0.0
        %2070 = vmatpush1.msra.mxu0 0.0
        %2071 = vmatprep.subr.mxu0 0.0
        %2072 = vmatpush1.msra.mxu0 0.0
        %2073 = vmatprep.subr.mxu0 0.0
        %2074 = vmatpush1.msra.mxu0 0.0
        %2075 = vmatprep.subr.mxu0 0.0
        %2076 = vmatpush1.msra.mxu0 0.0
        %2077 = vmatprep.subr.mxu0 0.0
        %2078 = vmatpush1.msra.mxu0 0.0
        %2079 = vmatprep.subr.mxu0 0.0
        %2080 = vmatpush1.msra.mxu0 0.0
        %2081 = vmatprep.subr.mxu0 0.0
        %2082 = vmatpush1.msra.mxu0 0.0
        %2083 = vmatprep.subr.mxu0 0.0
        %2084 = vmatpush1.msra.mxu0 0.0
        %2085 = vmatprep.subr.mxu0 0.0
        %2086 = vmatpush1.msra.mxu0 0.0
        %2087 = vmatprep.subr.mxu0 0.0
        %2088 = vmatpush1.msra.mxu0 0.0
        %2089 = vmatprep.subr.mxu0 0.0
        %2090 = vmatpush1.msra.mxu0 0.0
        %2091 = vmatprep.subr.mxu0 0.0
        %2092 = vmatpush1.msra.mxu0 0.0
        %2093 = vmatprep.subr.mxu0 0.0
        %2094 = vmatpush1.msra.mxu0 0.0
        %2095 = vmatprep.subr.mxu0 0.0
        %2096 = vmatpush1.msra.mxu0 0.0
        %2097 = vmatprep.subr.mxu0 0.0
        %2098 = vmatpush1.msra.mxu0 0.0
        %2099 = vmatprep.subr.mxu0 0.0
        %2100 = vmatpush1.msra.mxu0 0.0
        %2101 = vmatprep.subr.mxu0 0.0
        %2102 = vmatpush1.msra.mxu0 0.0
        %2103 = vmatprep.subr.mxu0 0.0
        %2104 = vmatpush1.msra.mxu0 0.0
        %2105 = vmatprep.subr.mxu0 0.0
        %2106 = vmatpush1.msra.mxu0 0.0
        %2107 = vmatprep.subr.mxu0 0.0
        %2108 = vmatpush1.msra.mxu0 0.0
        %2109 = vmatprep.subr.mxu0 0.0
        %2110 = vmatpush1.msra.mxu0 0.0
        %2111 = vmatprep.subr.mxu0 0.0
        %2112 = vmatpush1.msra.mxu0 0.0
        %2113 = vmatprep.subr.mxu0 0.0
        %2114 = vmatpush1.msra.mxu0 0.0
        %2115 = vmatprep.subr.mxu0 0.0
        %2116 = vmatpush1.msra.mxu0 0.0
        %2117 = vmatprep.subr.mxu0 0.0
        %2118 = vmatpush1.msra.mxu0 0.0
        %2119 = vmatprep.subr.mxu0 0.0
        %2120 = vmatpush1.msra.mxu0 0.0
        %2121 = vmatprep.subr.mxu0 0.0
        %2122 = vmatpush1.msra.mxu0 0.0
        %2123 = vmatprep.mubr.f32.mxu0 0.0
        %2124 = vmatmul.mubr.f32.gmra.mrb[0].mxu0 %v2057
        %v2125 = vpop.f32.mrb[0].mxu0
        %v2126 = vadd.f32 0.0, %v2125
        %v2127 = vpop.f32.mrb[0].mxu0
        %2128 = vdwg.mxu0
        %v2129 = vsel %vm497, %v1152, 0
        %2131 = vmatprep.subr.mxu0 0.0
        %2132 = vmatpush1.msra.mxu0 %v1155
        %2133 = vmatprep.subr.mxu0 0.0
        %2134 = vmatpush1.msra.mxu0 0.0
        %2135 = vmatprep.subr.mxu0 0.0
        %2136 = vmatpush1.msra.mxu0 0.0
        %2137 = vmatprep.subr.mxu0 0.0
        %2138 = vmatpush1.msra.mxu0 0.0
        %2139 = vmatprep.subr.mxu0 0.0
        %2140 = vmatpush1.msra.mxu0 0.0
        %2141 = vmatprep.subr.mxu0 0.0
        %2142 = vmatpush1.msra.mxu0 0.0
        %2143 = vmatprep.subr.mxu0 0.0
        %2144 = vmatpush1.msra.mxu0 0.0
        %2145 = vmatprep.subr.mxu0 0.0
        %2146 = vmatpush1.msra.mxu0 0.0
        %2147 = vmatprep.subr.mxu0 0.0
        %2148 = vmatpush1.msra.mxu0 0.0
        %2149 = vmatprep.subr.mxu0 0.0
        %2150 = vmatpush1.msra.mxu0 0.0
        %2151 = vmatprep.subr.mxu0 0.0
        %2152 = vmatpush1.msra.mxu0 0.0
        %2153 = vmatprep.subr.mxu0 0.0
        %2154 = vmatpush1.msra.mxu0 0.0
        %2155 = vmatprep.subr.mxu0 0.0
        %2156 = vmatpush1.msra.mxu0 0.0
        %2157 = vmatprep.subr.mxu0 0.0
        %2158 = vmatpush1.msra.mxu0 0.0
        %2159 = vmatprep.subr.mxu0 0.0
        %2160 = vmatpush1.msra.mxu0 0.0
        %2161 = vmatprep.subr.mxu0 0.0
        %2162 = vmatpush1.msra.mxu0 0.0
        %2163 = vmatprep.subr.mxu0 0.0
        %2164 = vmatpush1.msra.mxu0 0.0
        %2165 = vmatprep.subr.mxu0 0.0
        %2166 = vmatpush1.msra.mxu0 0.0
        %2167 = vmatprep.subr.mxu0 0.0
        %2168 = vmatpush1.msra.mxu0 0.0
        %2169 = vmatprep.subr.mxu0 0.0
        %2170 = vmatpush1.msra.mxu0 0.0
        %2171 = vmatprep.subr.mxu0 0.0
        %2172 = vmatpush1.msra.mxu0 0.0
        %2173 = vmatprep.subr.mxu0 0.0
        %2174 = vmatpush1.msra.mxu0 0.0
        %2175 = vmatprep.subr.mxu0 0.0
        %2176 = vmatpush1.msra.mxu0 0.0
        %2177 = vmatprep.subr.mxu0 0.0
        %2178 = vmatpush1.msra.mxu0 0.0
        %2179 = vmatprep.subr.mxu0 0.0
        %2180 = vmatpush1.msra.mxu0 0.0
        %2181 = vmatprep.subr.mxu0 0.0
        %2182 = vmatpush1.msra.mxu0 0.0
        %2183 = vmatprep.subr.mxu0 0.0
        %2184 = vmatpush1.msra.mxu0 0.0
        %2185 = vmatprep.subr.mxu0 0.0
        %2186 = vmatpush1.msra.mxu0 0.0
        %2187 = vmatprep.subr.mxu0 0.0
        %2188 = vmatpush1.msra.mxu0 0.0
        %2189 = vmatprep.subr.mxu0 0.0
        %2190 = vmatpush1.msra.mxu0 0.0
        %2191 = vmatprep.subr.mxu0 0.0
        %2192 = vmatpush1.msra.mxu0 0.0
        %2193 = vmatprep.subr.mxu0 0.0
        %2194 = vmatpush1.msra.mxu0 0.0
        %2195 = vmatprep.mubr.f32.mxu0 0.0
        %2196 = vmatmul.mubr.f32.gmra.mrb[0].mxu0 %v2129
        %v2197 = vpop.f32.mrb[0].mxu0
        %v2198 = vadd.f32 %v2126, %v2197
        %v2199 = vpop.f32.mrb[0].mxu0
        %2200 = vdwg.mxu0
        %v2201 = vrot.slane %v1152, 4
        %v2202 = vsel %vm497, %v2201, 0
        %2204 = vmatprep.subr.mxu0 0.0
        %2205 = vmatpush1.msra.mxu0 %v1157
        %2206 = vmatprep.subr.mxu0 0.0
        %2207 = vmatpush1.msra.mxu0 0.0
        %2208 = vmatprep.subr.mxu0 0.0
        %2209 = vmatpush1.msra.mxu0 0.0
        %2210 = vmatprep.subr.mxu0 0.0
        %2211 = vmatpush1.msra.mxu0 0.0
        %2212 = vmatprep.subr.mxu0 0.0
        %2213 = vmatpush1.msra.mxu0 0.0
        %2214 = vmatprep.subr.mxu0 0.0
        %2215 = vmatpush1.msra.mxu0 0.0
        %2216 = vmatprep.subr.mxu0 0.0
        %2217 = vmatpush1.msra.mxu0 0.0
        %2218 = vmatprep.subr.mxu0 0.0
        %2219 = vmatpush1.msra.mxu0 0.0
        %2220 = vmatprep.subr.mxu0 0.0
        %2221 = vmatpush1.msra.mxu0 0.0
        %2222 = vmatprep.subr.mxu0 0.0
        %2223 = vmatpush1.msra.mxu0 0.0
        %2224 = vmatprep.subr.mxu0 0.0
        %2225 = vmatpush1.msra.mxu0 0.0
        %2226 = vmatprep.subr.mxu0 0.0
        %2227 = vmatpush1.msra.mxu0 0.0
        %2228 = vmatprep.subr.mxu0 0.0
        %2229 = vmatpush1.msra.mxu0 0.0
        %2230 = vmatprep.subr.mxu0 0.0
        %2231 = vmatpush1.msra.mxu0 0.0
        %2232 = vmatprep.subr.mxu0 0.0
        %2233 = vmatpush1.msra.mxu0 0.0
        %2234 = vmatprep.subr.mxu0 0.0
        %2235 = vmatpush1.msra.mxu0 0.0
        %2236 = vmatprep.subr.mxu0 0.0
        %2237 = vmatpush1.msra.mxu0 0.0
        %2238 = vmatprep.subr.mxu0 0.0
        %2239 = vmatpush1.msra.mxu0 0.0
        %2240 = vmatprep.subr.mxu0 0.0
        %2241 = vmatpush1.msra.mxu0 0.0
        %2242 = vmatprep.subr.mxu0 0.0
        %2243 = vmatpush1.msra.mxu0 0.0
        %2244 = vmatprep.subr.mxu0 0.0
        %2245 = vmatpush1.msra.mxu0 0.0
        %2246 = vmatprep.subr.mxu0 0.0
        %2247 = vmatpush1.msra.mxu0 0.0
        %2248 = vmatprep.subr.mxu0 0.0
        %2249 = vmatpush1.msra.mxu0 0.0
        %2250 = vmatprep.subr.mxu0 0.0
        %2251 = vmatpush1.msra.mxu0 0.0
        %2252 = vmatprep.subr.mxu0 0.0
        %2253 = vmatpush1.msra.mxu0 0.0
        %2254 = vmatprep.subr.mxu0 0.0
        %2255 = vmatpush1.msra.mxu0 0.0
        %2256 = vmatprep.subr.mxu0 0.0
        %2257 = vmatpush1.msra.mxu0 0.0
        %2258 = vmatprep.subr.mxu0 0.0
        %2259 = vmatpush1.msra.mxu0 0.0
        %2260 = vmatprep.subr.mxu0 0.0
        %2261 = vmatpush1.msra.mxu0 0.0
        %2262 = vmatprep.subr.mxu0 0.0
        %2263 = vmatpush1.msra.mxu0 0.0
        %2264 = vmatprep.subr.mxu0 0.0
        %2265 = vmatpush1.msra.mxu0 0.0
        %2266 = vmatprep.subr.mxu0 0.0
        %2267 = vmatpush1.msra.mxu0 0.0
        %2268 = vmatprep.mubr.f32.mxu0 0.0
        %2269 = vmatmul.mubr.f32.gmra.mrb[0].mxu0 %v2202
        %v2270 = vpop.f32.mrb[0].mxu0
        %v2271 = vadd.f32 0.0, %v2270
        %v2272 = vpop.f32.mrb[0].mxu0
        %2273 = vdwg.mxu0
        %v2274 = vadd.f32 %v2198, %v2271
        %v2275 = vrot.slane %v1152, 6
        %v2276 = vsel %vm497, %v2275, 0
        %2278 = vmatprep.subr.mxu0 0.0
        %2279 = vmatpush1.msra.mxu0 %v1158
        %2280 = vmatprep.subr.mxu0 0.0
        %2281 = vmatpush1.msra.mxu0 0.0
        %2282 = vmatprep.subr.mxu0 0.0
        %2283 = vmatpush1.msra.mxu0 0.0
        %2284 = vmatprep.subr.mxu0 0.0
        %2285 = vmatpush1.msra.mxu0 0.0
        %2286 = vmatprep.subr.mxu0 0.0
        %2287 = vmatpush1.msra.mxu0 0.0
        %2288 = vmatprep.subr.mxu0 0.0
        %2289 = vmatpush1.msra.mxu0 0.0
        %2290 = vmatprep.subr.mxu0 0.0
        %2291 = vmatpush1.msra.mxu0 0.0
        %2292 = vmatprep.subr.mxu0 0.0
        %2293 = vmatpush1.msra.mxu0 0.0
        %2294 = vmatprep.subr.mxu0 0.0
        %2295 = vmatpush1.msra.mxu0 0.0
        %2296 = vmatprep.subr.mxu0 0.0
        %2297 = vmatpush1.msra.mxu0 0.0
        %2298 = vmatprep.subr.mxu0 0.0
        %2299 = vmatpush1.msra.mxu0 0.0
        %2300 = vmatprep.subr.mxu0 0.0
        %2301 = vmatpush1.msra.mxu0 0.0
        %2302 = vmatprep.subr.mxu0 0.0
        %2303 = vmatpush1.msra.mxu0 0.0
        %2304 = vmatprep.subr.mxu0 0.0
        %2305 = vmatpush1.msra.mxu0 0.0
        %2306 = vmatprep.subr.mxu0 0.0
        %2307 = vmatpush1.msra.mxu0 0.0
        %2308 = vmatprep.subr.mxu0 0.0
        %2309 = vmatpush1.msra.mxu0 0.0
        %2310 = vmatprep.subr.mxu0 0.0
        %2311 = vmatpush1.msra.mxu0 0.0
        %2312 = vmatprep.subr.mxu0 0.0
        %2313 = vmatpush1.msra.mxu0 0.0
        %2314 = vmatprep.subr.mxu0 0.0
        %2315 = vmatpush1.msra.mxu0 0.0
        %2316 = vmatprep.subr.mxu0 0.0
        %2317 = vmatpush1.msra.mxu0 0.0
        %2318 = vmatprep.subr.mxu0 0.0
        %2319 = vmatpush1.msra.mxu0 0.0
        %2320 = vmatprep.subr.mxu0 0.0
        %2321 = vmatpush1.msra.mxu0 0.0
        %2322 = vmatprep.subr.mxu0 0.0
        %2323 = vmatpush1.msra.mxu0 0.0
        %2324 = vmatprep.subr.mxu0 0.0
        %2325 = vmatpush1.msra.mxu0 0.0
        %2326 = vmatprep.subr.mxu0 0.0
        %2327 = vmatpush1.msra.mxu0 0.0
        %2328 = vmatprep.subr.mxu0 0.0
        %2329 = vmatpush1.msra.mxu0 0.0
        %2330 = vmatprep.subr.mxu0 0.0
        %2331 = vmatpush1.msra.mxu0 0.0
        %2332 = vmatprep.subr.mxu0 0.0
        %2333 = vmatpush1.msra.mxu0 0.0
        %2334 = vmatprep.subr.mxu0 0.0
        %2335 = vmatpush1.msra.mxu0 0.0
        %2336 = vmatprep.subr.mxu0 0.0
        %2337 = vmatpush1.msra.mxu0 0.0
        %2338 = vmatprep.subr.mxu0 0.0
        %2339 = vmatpush1.msra.mxu0 0.0
        %2340 = vmatprep.subr.mxu0 0.0
        %2341 = vmatpush1.msra.mxu0 0.0
        %2342 = vmatprep.mubr.f32.mxu0 0.0
        %2343 = vmatmul.mubr.f32.gmra.mrb[0].mxu0 %v2276
        %v2344 = vpop.f32.mrb[0].mxu0
        %v2345 = vadd.f32 0.0, %v2344
        %v2346 = vpop.f32.mrb[0].mxu0
        %2347 = vdwg.mxu0
        %v2348 = vadd.f32 %v2274, %v2345
        %v2349 = vadd.f32 %v2348, %v1458
        %2350 = vst.msk [vmem:[%s188 + $0x6] sm:$0x3] %vm1461, %v2349
        %s2351 = sand.u32 %s115, 1
        %s2352 = scalar_lea.sflag [#allocation3], %s2351
        %s2353 = sand.u32 %s115, 1
        %s2354 = smul.addr %s2353, 8
        %s2355 = scalar_lea.vmem [#allocation2], %s2354
        // Predicated region
        $region37: #{tpu_custom_call.1} parent=35 // pred_check
          %p2356 = pneg %p125
        $region38: #{tpu_custom_call.1} parent=35 // pred_check_branch
          %2358 = sbr.rel (%p2356) target = $region40
        $region39: #{tpu_custom_call.1} parent=35 // pred_region
          %s2360 = ssub.s32 128, 128
          %2361 = vsyncadd %s2352, %s2360
          %s2362 = smul.addr %s18, 128
          %s2363 = scalar_lea.hbm %s4, %s2362
          %s2365 = sshll.u32 %s2355, 4
          %s2366 = int_to_ptr.vmem [resolvable:$true] %s2365
          %2368 = dma.vmem_to_hbm [thread:$0]  %s2366, 128, %s2363, %s2352
        $region40: #{tpu_custom_call.1} parent=35 // pred_fallthru
          _
      $region36: #{tpu_custom_call.1} parent=5 // pred_fallthru
        _
      %p2369 = scmp.le.s32.totalorder 2, %s13
      // Predicated region
      $region41: #{tpu_custom_call.1} parent=5 // pred_check
        %p2370 = pneg %p2369
      $region42: #{tpu_custom_call.1} parent=5 // pred_check_branch
        %2372 = sbr.rel (%p2370) target = $region44
      $region43: #{tpu_custom_call.1} parent=5 // pred_region
        %s2373 = ssub.s32 %s13, 2
        // Predicated region
        $region45: #{tpu_custom_call.1} parent=43 // pred_check
          %p2374 = pneg %p131
        $region46: #{tpu_custom_call.1} parent=43 // pred_check_branch
          %2376 = sbr.rel (%p2374) target = $region48
        $region47: #{tpu_custom_call.1} parent=43 // pred_region
          %s2377 = sand.u32 %s116, 1
          %s2378 = scalar_lea.sflag [#allocation3], %s2377
          %s2379 = sand.u32 %s116, 1
          %s2380 = smul.addr %s2379, 8
          %s2381 = scalar_lea.vmem [#allocation2], %s2380
          %2382 = dma.done %s2378, 128
        $region48: #{tpu_custom_call.1} parent=43 // pred_fallthru
          _
      $region44: #{tpu_custom_call.1} parent=5 // pred_fallthru
        _
    $region6: #{tpu_custom_call.1} parent=1 // loop_footer
      %s17 = sadd.s32 1, %s13
    $region7: #{tpu_custom_call.1} parent=1 // loop_footer_branch
      %12 = sbr.rel target = $region3
    $region8: #{tpu_custom_call.1} parent=1 // loop_exit
      _
    %2383 = vsyncpa [#allocation3], 1
    %s2384 = scalar_lea.sflag [#allocation3], 1
    %2385 = vsyncpa %s2384, 1

</llo_original>
